<compile_context>
chip_gen: v5e
topology: v5e:2x2
jax: 0.10.0
libtpu: 0.0.40
codegen_flags: <defaults>
</compile_context>

<pallas_src>
import functools

import jax
import jax.numpy as jnp
from jax import lax
from jax.experimental import pallas as pl
from jax.experimental.pallas import tpu as pltpu


def _round_up(v, m):
    return (v + m - 1) // m * m


def _pick_tile(n_pad):
    """Largest of (512, 256, 128) dividing n_pad, preferring an even tile count
    so v7x's two TensorCores split the parallel row axis evenly."""
    for t in (512, 256, 128):
        if n_pad % t == 0 and (n_pad // t) % 2 == 0:
            return t
    for t in (512, 256, 128):
        if n_pad % t == 0:
            return t
    return 128


def _agnn_layer_kernel(nnz_ref, q_ref, kT_ref, v_ref, adj_ref,
                       y_ref, yn_ref, m_sc, l_sc, acc_sc, *, act, use_bf16):
    """One AGNNConv layer, flash-style over (row tile i, source-column tile kv).

    nnz  : [RT, CT] int32 (SMEM, scalar-prefetched) edge count per adj block
    q    : [TM, F]  L2-normalized features of this tile's target nodes
    kT   : [F, TK]  beta * L2-normalized features of this column's source nodes
    v    : [TK, F]  raw features of this column's source nodes (messages)
    adj  : [TM, TK] int8 edge mask (1 = edge source->target, self loops incl.)
    y    : [TM, F]  activation(sum_j alpha_ij * x_j)      (written at last kv)
    yn   : [TM, F]  L2-normalized y (next layer's attention input)
    """
    i = pl.program_id(0)
    kv = pl.program_id(1)

    @pl.when(kv == 0)
    def _init():
        m_sc[...] = jnp.full(m_sc.shape, -1e30, dtype=jnp.float32)
        l_sc[...] = jnp.zeros(l_sc.shape, dtype=jnp.float32)
        acc_sc[...] = jnp.zeros(acc_sc.shape, dtype=jnp.float32)

    # Skip adjacency blocks that contain no edges at all (sparsity win).
    @pl.when(nnz_ref[i, kv] > 0)
    def _block():
        q = q_ref[...]
        k = kT_ref[...]
        if use_bf16:
            q = q.astype(jnp.bfloat16)
            k = k.astype(jnp.bfloat16)
        # logits for this block: s[t, s'] = beta * <q_t, k_s'> (beta folded in k)
        s = jnp.dot(q, k, preferred_element_type=jnp.float32)

        # int8 mask in HBM/VMEM; one widen pass over a [TM,TK] tile only.
        adj_f = adj_ref[...].astype(jnp.float32)
        edge = adj_f > 0.0
        s = jnp.where(edge, s, jnp.float32(-1e30))

        m_prev = m_sc[...]
        m_new = jnp.maximum(m_prev, jnp.max(s, axis=-1, keepdims=True))
        scale = jnp.exp(m_prev - m_new)
        # Explicitly zero non-edges: for a row with no edges in ANY block so
        # far, m_new stays at -1e30 and exp(s - m_new) would be 1, not 0.
        p = jnp.where(edge, jnp.exp(s - m_new), jnp.float32(0.0))

        l_sc[...] = scale * l_sc[...] + jnp.sum(p, axis=-1, keepdims=True)
        v = v_ref[...]
        if use_bf16:
            p = p.astype(jnp.bfloat16)
            v = v.astype(jnp.bfloat16)
        acc_sc[...] = scale * acc_sc[...] + jnp.dot(
            p, v, preferred_element_type=jnp.float32)
        m_sc[...] = m_new

    @pl.when(kv == pl.num_programs(1) - 1)
    def _finalize():
        # every row has a self loop => l >= 1, the reciprocal is safe.
        y = acc_sc[...] * pl.reciprocal(l_sc[...], approx=False)
        if act == "relu":
            y = jnp.maximum(y, 0.0)
        else:  # "tanh" (output layer)
            y = jnp.tanh(y)
        y_ref[...] = y.astype(y_ref.dtype)
        # F.normalize(y, p=2, dim=-1) == y * rsqrt(max(sum(y^2), 1e-24))
        inv_nrm = lax.rsqrt(
            jnp.maximum(jnp.sum(y * y, axis=-1, keepdims=True), jnp.float32(1e-24)))
        yn_ref[...] = (y * inv_nrm).astype(yn_ref.dtype)


def _agnn_layer_call(nnz, x, xn, knT, adj, *, tm, tk, act, use_bf16):
    n_pad, f_pad = x.shape
    grid = (n_pad // tm, n_pad // tk)
    kernel = functools.partial(_agnn_layer_kernel, act=act, use_bf16=use_bf16)
    cost = pl.CostEstimate(
        flops=4 * n_pad * n_pad * f_pad,                       # two matmuls
        transcendentals=n_pad * n_pad + n_pad * f_pad,         # exp (+ tanh bound)
        bytes_accessed=(n_pad * n_pad                          # int8 adjacency
                        + 2 * grid[0] * n_pad * f_pad * 4      # k/v streams per row tile
                        + 3 * n_pad * f_pad * 4),              # q stream + 2 outputs
    )
    y, yn = pl.pallas_call(
        kernel,
        grid_spec=pltpu.PrefetchScalarGridSpec(
            num_scalar_prefetch=1,                              # nnz table -> SMEM
            grid=grid,
            in_specs=[
                pl.BlockSpec((tm, f_pad), lambda i, kv, nz: (i, 0)),   # q   row tile
                pl.BlockSpec((f_pad, tk), lambda i, kv, nz: (0, kv)),  # k^T col tile
                pl.BlockSpec((tk, f_pad), lambda i, kv, nz: (kv, 0)),  # v   col tile
                pl.BlockSpec((tm, tk), lambda i, kv, nz: (i, kv)),     # adj block
            ],
            out_specs=(
                pl.BlockSpec((tm, f_pad), lambda i, kv, nz: (i, 0)),   # y   tile
                pl.BlockSpec((tm, f_pad), lambda i, kv, nz: (i, 0)),   # yn  tile
            ),
            scratch_shapes=[
                pltpu.VMEM((tm, 1), jnp.float32),       # running row max
                pltpu.VMEM((tm, 1), jnp.float32),       # running denominator
                pltpu.VMEM((tm, f_pad), jnp.float32),   # running numerator
            ],
        ),
        out_shape=(jax.ShapeDtypeStruct((n_pad, f_pad), jnp.float32),
                   jax.ShapeDtypeStruct((n_pad, f_pad), jnp.float32)),
        compiler_params=pltpu.CompilerParams(
            dimension_semantics=("parallel", "arbitrary"),
            vmem_limit_bytes=48 * 1024 * 1024),
        cost_estimate=cost,
    )(nnz, xn, knT, x, adj)
    return y, yn


def pagnn_forward(x, edge_index, betas, num_hidden_layers, *,
                  row_tile=None, col_tile=None, use_bf16_matmul=False):
    """x: [N, F] float32, edge_index: [2, E] int32,
    betas: [num_hidden_layers + 2] f32 (one learnable scalar per AGNNConv)."""
    n, f = x.shape
    n_pad = _round_up(max(n, 128), 128)
    f_pad = _round_up(max(f, 128), 128)
    tm = row_tile if row_tile is not None else _pick_tile(n_pad)
    tk = col_tile if col_tile is not None else _pick_tile(n_pad)
    assert n_pad % tm == 0 and n_pad % tk == 0

    # zero-pad features; padded rows/cols stay exactly zero through every layer.
    x_p = jnp.zeros((n_pad, f_pad), jnp.float32).at[:n, :f].set(
        x.astype(jnp.float32))

    # dense int8 adjacency mask adj[target, source] with self loops on every row.
    # Padded rows keep only the self loop (softmax denom > 0); their features
    # are zero so they never influence real nodes and are masked as sources.
    src, dst = edge_index[0], edge_index[1]
    adj = jnp.zeros((n_pad, n_pad), jnp.int8).at[dst, src].set(1)
    adj = jnp.maximum(adj, jnp.eye(n_pad, dtype=jnp.int8))

    # per-(row-tile, col-tile) edge counts (scalar-prefetched block-skip table).
    nnz = adj.astype(jnp.int32).reshape(
        n_pad // tm, tm, n_pad // tk, tk).sum(axis=(1, 3))

    # dropout is the eval-mode identity (no RNG in the forward pass).
    num_layers = num_hidden_layers + 2         # conv_input + hidden + conv_output
    acts = ["relu"] * (num_layers - 1) + ["tanh"]

    y = x_p
    yn = x_p * lax.rsqrt(
        jnp.maximum(jnp.sum(x_p * x_p, axis=-1, keepdims=True), 1e-24))
    for l in range(num_layers):
        # one [F, N] transpose per layer at XLA level so the in-kernel logits
        # matmul is a plain [TM,F]@[F,TK]; beta folds into this copy for free
        # (beta * <q, k> == <q, beta * k>), so the kernel needs no beta operand.
        knT = (yn * betas[l]).T
        y, yn = _agnn_layer_call(nnz, y, yn, knT, adj,
                                 tm=tm, tk=tk, act=acts[l],
                                 use_bf16=use_bf16_matmul)
    return y[:n, :f].astype(x.dtype)


def _reference_forward(x, edge_index, betas, num_hidden_layers):
    """Pure-JAX reference using the same dense formulation (torch semantics)."""
    n, _ = x.shape
    src, dst = edge_index[0], edge_index[1]
    adj = jnp.zeros((n, n), jnp.float32).at[dst, src].set(1.0)
    adj = jnp.maximum(adj, jnp.eye(n, dtype=jnp.float32))

    def layer(x, beta):
        x_n = x / jnp.maximum(jnp.linalg.norm(x, axis=-1, keepdims=True), 1e-12)
        s = beta * (x_n @ x_n.T)
        s = jnp.where(adj > 0, s, -1e30)
        p = jnp.exp(s - jnp.max(s, axis=-1, keepdims=True)) * adj
        alpha = p / jnp.sum(p, axis=-1, keepdims=True)
        return alpha @ x

    x = jax.nn.relu(layer(x, betas[0]))
    for l in range(num_hidden_layers):
        x = jax.nn.relu(layer(x, betas[1 + l]))
    return jnp.tanh(layer(x, betas[1 + num_hidden_layers]))


if __name__ == "__main__":
    key = jax.random.PRNGKey(0)
    k_x, k_e = jax.random.split(key)

    # small but multi-tile: n_pad = 384 -> a 3x3 grid of 128x128 adjacency
    # blocks; random edges live among the first 96 nodes so several blocks are
    # empty and the pl.when block-skip path is exercised.
    N, F, E = 300, 32, 600
    num_hidden_layers = 2          # total AGNN convs = 1 + 2 + 1 = 4

    x = jax.random.normal(k_x, (N, F), dtype=jnp.float32)
    edge_index = jax.random.randint(k_e, (2, E), 0, 96, dtype=jnp.int32)

    # AGNNConv's learnable scalar beta is initialized to 1.0 (one per conv).
    betas = jnp.ones((num_hidden_layers + 2,), dtype=jnp.float32)

    out = pagnn_forward(x, edge_index, betas, num_hidden_layers)
    out = jax.block_until_ready(out)

    ref = _reference_forward(x, edge_index, betas, num_hidden_layers)
    assert out.shape == (N, F)
    assert jnp.allclose(out, ref, atol=1e-4, rtol=1e-4), "mismatch vs JAX reference"

    # optional bf16-MXU path (v6e/v7x): bf16 operands, f32 accumulation,
    # masking/softmax math stays in f32.
    out_bf16 = jax.block_until_ready(
        pagnn_forward(x, edge_index, betas, num_hidden_layers,
                      use_bf16_matmul=True))
    assert out_bf16.shape == (N, F)
    assert bool(jnp.all(jnp.isfinite(out_bf16)))
    assert jnp.allclose(out_bf16, ref, atol=1e-1, rtol=1e-1), "bf16 path drifted"

    print("KERNEL_OK")
</pallas_src>

<mosaic_0001>
module attributes {stable_mosaic.version = 11 : i64} {
  func.func @_agnn_layer_kernel(%arg0: i32, %arg1: i32, %arg2: memref<3x3xi32, #tpu.memory_space<smem>>, %arg3: memref<128x128xf32, #tpu.memory_space<vmem>>, %arg4: memref<128x128xf32, #tpu.memory_space<vmem>>, %arg5: memref<128x128xf32, #tpu.memory_space<vmem>>, %arg6: memref<128x128xi8, #tpu.memory_space<vmem>>, %arg7: memref<128x128xf32, #tpu.memory_space<vmem>>, %arg8: memref<128x128xf32, #tpu.memory_space<vmem>>, %arg9: memref<128x1xf32, #tpu.memory_space<vmem>>, %arg10: memref<128x1xf32, #tpu.memory_space<vmem>>, %arg11: memref<128x128xf32, #tpu.memory_space<vmem>>) attributes {dimension_semantics = [#tpu.dimension_semantics<parallel>, #tpu.dimension_semantics<arbitrary>], iteration_bounds = array<i64: 3, 3>, scalar_prefetch = 1 : i64, scratch_operands = 3 : i64, tpu.core_type = #tpu.core_type<tc>, window_params = [{transform_indices = @transform_0, window_bounds = array<i64: 128, 128>}, {transform_indices = @transform_1, window_bounds = array<i64: 128, 128>}, {transform_indices = @transform_2, window_bounds = array<i64: 128, 128>}, {transform_indices = @transform_3, window_bounds = array<i64: 128, 128>}, {transform_indices = @transform_4, window_bounds = array<i64: 128, 128>}, {transform_indices = @transform_5, window_bounds = array<i64: 128, 128>}]} {
    %c0_i32 = arith.constant 0 : i32
    %0 = arith.cmpi eq, %arg1, %c0_i32 : i32
    %1 = arith.extui %0 : i1 to i32
    %c0_i32_0 = arith.constant 0 : i32
    %2 = arith.cmpi ne, %1, %c0_i32_0 : i32
    scf.if %2 {
      %cst = arith.constant -1.000000e+30 : f32
      %12 = vector.broadcast %cst : f32 to vector<128x1xf32>
      %c0 = arith.constant 0 : index
      %c0_4 = arith.constant 0 : index
      %13 = vector.load %arg9[%c0, %c0_4] : memref<128x1xf32, #tpu.memory_space<vmem>>, vector<128x1xf32>
      tpu.vector_store %arg9[%c0, %c0_4], %12 {strides = array<i32>} : memref<128x1xf32, #tpu.memory_space<vmem>>, vector<128x1xf32>,
      %cst_5 = arith.constant 0.000000e+00 : f32
      %14 = vector.broadcast %cst_5 : f32 to vector<128x1xf32>
      %c0_6 = arith.constant 0 : index
      %c0_7 = arith.constant 0 : index
      %15 = vector.load %arg10[%c0_6, %c0_7] : memref<128x1xf32, #tpu.memory_space<vmem>>, vector<128x1xf32>
      tpu.vector_store %arg10[%c0_6, %c0_7], %14 {strides = array<i32>} : memref<128x1xf32, #tpu.memory_space<vmem>>, vector<128x1xf32>,
      %cst_8 = arith.constant 0.000000e+00 : f32
      %16 = vector.broadcast %cst_8 : f32 to vector<128x128xf32>
      %c0_9 = arith.constant 0 : index
      %c0_10 = arith.constant 0 : index
      %17 = vector.load %arg11[%c0_9, %c0_10] : memref<128x128xf32, #tpu.memory_space<vmem>>, vector<128x128xf32>
      tpu.vector_store %arg11[%c0_9, %c0_10], %16 {strides = array<i32>} : memref<128x128xf32, #tpu.memory_space<vmem>>, vector<128x128xf32>,
    } else {
    }
    %3 = arith.index_cast %arg0 : i32 to index
    %4 = arith.index_cast %arg1 : i32 to index
    %5 = memref.load %arg2[%3, %4] : memref<3x3xi32, #tpu.memory_space<smem>>
    %c0_i32_1 = arith.constant 0 : i32
    %6 = arith.cmpi sgt, %5, %c0_i32_1 : i32
    %7 = arith.extui %6 : i1 to i32
    %c0_i32_2 = arith.constant 0 : i32
    %8 = arith.cmpi ne, %7, %c0_i32_2 : i32
    scf.if %8 {
      %c0 = arith.constant 0 : index
      %c0_4 = arith.constant 0 : index
      %12 = vector.load %arg3[%c0, %c0_4] : memref<128x128xf32, #tpu.memory_space<vmem>>, vector<128x128xf32>
      %c0_5 = arith.constant 0 : index
      %c0_6 = arith.constant 0 : index
      %13 = vector.load %arg4[%c0_5, %c0_6] : memref<128x128xf32, #tpu.memory_space<vmem>>, vector<128x128xf32>
      %cst = arith.constant dense<0.000000e+00> : vector<128x128xf32>
      %14 = tpu.matmul %12, %13, %cst {dimension_numbers = #tpu.dot_dimension_numbers<[1], [0], [0], [1], [0, 0, 1, 1], [], []>} : vector<128x128xf32>, vector<128x128xf32>, vector<128x128xf32> -> vector<128x128xf32>
      %c0_7 = arith.constant 0 : index
      %c0_8 = arith.constant 0 : index
      %15 = vector.load %arg6[%c0_7, %c0_8] : memref<128x128xi8, #tpu.memory_space<vmem>>, vector<128x128xi8>
      %16 = arith.sitofp %15 : vector<128x128xi8> to vector<128x128xf32>
      %cst_9 = arith.constant 0.000000e+00 : f32
      %17 = vector.broadcast %cst_9 : f32 to vector<128x128xf32>
      %18 = arith.cmpf ogt, %16, %17 : vector<128x128xf32>
      %cst_10 = arith.constant -1.000000e+30 : f32
      %19 = vector.broadcast %cst_10 : f32 to vector<128x128xf32>
      %20 = arith.select %18, %14, %19 : vector<128x128xi1>, vector<128x128xf32>
      %c0_11 = arith.constant 0 : index
      %c0_12 = arith.constant 0 : index
      %21 = vector.load %arg9[%c0_11, %c0_12] : memref<128x1xf32, #tpu.memory_space<vmem>>, vector<128x1xf32>
      %cst_13 = arith.constant dense<0xFF800000> : vector<128xf32>
      %22 = vector.multi_reduction <maximumf>, %20, %cst_13 [1] : vector<128x128xf32> to vector<128xf32>
      %23 = vector.shape_cast %22 : vector<128xf32> to vector<128x1xf32>
      %24 = arith.maximumf %21, %23 : vector<128x1xf32>
      %25 = arith.subf %21, %24 : vector<128x1xf32>
      %26 = math.exp %25 : vector<128x1xf32>
      %27 = vector.broadcast %24 : vector<128x1xf32> to vector<128x128xf32>
      %28 = arith.subf %20, %27 : vector<128x128xf32>
      %29 = math.exp %28 : vector<128x128xf32>
      %cst_14 = arith.constant 0.000000e+00 : f32
      %30 = vector.broadcast %cst_14 : f32 to vector<128x128xf32>
      %31 = arith.select %18, %29, %30 : vector<128x128xi1>, vector<128x128xf32>
      %c0_15 = arith.constant 0 : index
      %c0_16 = arith.constant 0 : index
      %32 = vector.load %arg10[%c0_15, %c0_16] : memref<128x1xf32, #tpu.memory_space<vmem>>, vector<128x1xf32>
      %33 = arith.mulf %26, %32 : vector<128x1xf32>
      %cst_17 = arith.constant dense<0.000000e+00> : vector<128xf32>
      %34 = vector.multi_reduction <add>, %31, %cst_17 [1] : vector<128x128xf32> to vector<128xf32>
      %35 = vector.shape_cast %34 : vector<128xf32> to vector<128x1xf32>
      %36 = arith.addf %33, %35 : vector<128x1xf32>
      %c0_18 = arith.constant 0 : index
      %c0_19 = arith.constant 0 : index
      %37 = vector.load %arg10[%c0_18, %c0_19] : memref<128x1xf32, #tpu.memory_space<vmem>>, vector<128x1xf32>
      tpu.vector_store %arg10[%c0_18, %c0_19], %36 {strides = array<i32>} : memref<128x1xf32, #tpu.memory_space<vmem>>, vector<128x1xf32>,
      %c0_20 = arith.constant 0 : index
      %c0_21 = arith.constant 0 : index
      %38 = vector.load %arg5[%c0_20, %c0_21] : memref<128x128xf32, #tpu.memory_space<vmem>>, vector<128x128xf32>
      %c0_22 = arith.constant 0 : index
      %c0_23 = arith.constant 0 : index
      %39 = vector.load %arg11[%c0_22, %c0_23] : memref<128x128xf32, #tpu.memory_space<vmem>>, vector<128x128xf32>
      %40 = vector.broadcast %26 : vector<128x1xf32> to vector<128x128xf32>
      %41 = arith.mulf %40, %39 : vector<128x128xf32>
      %cst_24 = arith.constant dense<0.000000e+00> : vector<128x128xf32>
      %42 = tpu.matmul %31, %38, %cst_24 {dimension_numbers = #tpu.dot_dimension_numbers<[1], [0], [0], [1], [0, 0, 1, 1], [], []>} : vector<128x128xf32>, vector<128x128xf32>, vector<128x128xf32> -> vector<128x128xf32>
      %43 = arith.addf %41, %42 : vector<128x128xf32>
      %c0_25 = arith.constant 0 : index
      %c0_26 = arith.constant 0 : index
      %44 = vector.load %arg11[%c0_25, %c0_26] : memref<128x128xf32, #tpu.memory_space<vmem>>, vector<128x128xf32>
      tpu.vector_store %arg11[%c0_25, %c0_26], %43 {strides = array<i32>} : memref<128x128xf32, #tpu.memory_space<vmem>>, vector<128x128xf32>,
      %c0_27 = arith.constant 0 : index
      %c0_28 = arith.constant 0 : index
      %45 = vector.load %arg9[%c0_27, %c0_28] : memref<128x1xf32, #tpu.memory_space<vmem>>, vector<128x1xf32>
      tpu.vector_store %arg9[%c0_27, %c0_28], %24 {strides = array<i32>} : memref<128x1xf32, #tpu.memory_space<vmem>>, vector<128x1xf32>,
    } else {
    }
    %c2_i32 = arith.constant 2 : i32
    %9 = arith.cmpi eq, %arg1, %c2_i32 : i32
    %10 = arith.extui %9 : i1 to i32
    %c0_i32_3 = arith.constant 0 : i32
    %11 = arith.cmpi ne, %10, %c0_i32_3 : i32
    scf.if %11 {
      %c0 = arith.constant 0 : index
      %c0_4 = arith.constant 0 : index
      %12 = vector.load %arg11[%c0, %c0_4] : memref<128x128xf32, #tpu.memory_space<vmem>>, vector<128x128xf32>
      %c0_5 = arith.constant 0 : index
      %c0_6 = arith.constant 0 : index
      %13 = vector.load %arg10[%c0_5, %c0_6] : memref<128x1xf32, #tpu.memory_space<vmem>>, vector<128x1xf32>
      %14 = tpu.reciprocal %13 : vector<128x1xf32> -> vector<128x1xf32>
      %15 = vector.broadcast %14 : vector<128x1xf32> to vector<128x128xf32>
      %16 = arith.mulf %12, %15 : vector<128x128xf32>
      %cst = arith.constant 0.000000e+00 : f32
      %17 = vector.broadcast %cst : f32 to vector<128x128xf32>
      %18 = arith.maximumf %16, %17 : vector<128x128xf32>
      %c0_7 = arith.constant 0 : index
      %c0_8 = arith.constant 0 : index
      %19 = vector.load %arg7[%c0_7, %c0_8] : memref<128x128xf32, #tpu.memory_space<vmem>>, vector<128x128xf32>
      tpu.vector_store %arg7[%c0_7, %c0_8], %18 {strides = array<i32>} : memref<128x128xf32, #tpu.memory_space<vmem>>, vector<128x128xf32>,
      %20 = arith.mulf %18, %18 : vector<128x128xf32>
      %cst_9 = arith.constant dense<0.000000e+00> : vector<128xf32>
      %21 = vector.multi_reduction <add>, %20, %cst_9 [1] : vector<128x128xf32> to vector<128xf32>
      %22 = vector.shape_cast %21 : vector<128xf32> to vector<128x1xf32>
      %cst_10 = arith.constant 1.000000e-24 : f32
      %23 = vector.broadcast %cst_10 : f32 to vector<128x1xf32>
      %24 = arith.maximumf %22, %23 : vector<128x1xf32>
      %25 = math.rsqrt %24 : vector<128x1xf32>
      %26 = vector.broadcast %25 : vector<128x1xf32> to vector<128x128xf32>
      %27 = arith.mulf %18, %26 : vector<128x128xf32>
      %c0_11 = arith.constant 0 : index
      %c0_12 = arith.constant 0 : index
      %28 = vector.load %arg8[%c0_11, %c0_12] : memref<128x128xf32, #tpu.memory_space<vmem>>, vector<128x128xf32>
      tpu.vector_store %arg8[%c0_11, %c0_12], %27 {strides = array<i32>} : memref<128x128xf32, #tpu.memory_space<vmem>>, vector<128x128xf32>,
    } else {
    }
    return
  }
  func.func @transform_0(%arg0: i32, %arg1: i32, %arg2: memref<3x3xi32, #tpu.memory_space<smem>>) -> (i32, i32) {
    %c0_i32 = arith.constant 0 : i32
    %c0_i32_0 = arith.constant 0 : i32
    return %arg0, %c0_i32 : i32, i32
  }
  func.func @transform_1(%arg0: i32, %arg1: i32, %arg2: memref<3x3xi32, #tpu.memory_space<smem>>) -> (i32, i32) {
    %c0_i32 = arith.constant 0 : i32
    %c0_i32_0 = arith.constant 0 : i32
    return %c0_i32, %arg1 : i32, i32
  }
  func.func @transform_2(%arg0: i32, %arg1: i32, %arg2: memref<3x3xi32, #tpu.memory_space<smem>>) -> (i32, i32) {
    %c0_i32 = arith.constant 0 : i32
    %c0_i32_0 = arith.constant 0 : i32
    return %arg1, %c0_i32 : i32, i32
  }
  func.func @transform_3(%arg0: i32, %arg1: i32, %arg2: memref<3x3xi32, #tpu.memory_space<smem>>) -> (i32, i32) {
    %c0_i32 = arith.constant 0 : i32
    return %arg0, %arg1 : i32, i32
  }
  func.func @transform_4(%arg0: i32, %arg1: i32, %arg2: memref<3x3xi32, #tpu.memory_space<smem>>) -> (i32, i32) {
    %c0_i32 = arith.constant 0 : i32
    %c0_i32_0 = arith.constant 0 : i32
    return %arg0, %c0_i32 : i32, i32
  }
  func.func @transform_5(%arg0: i32, %arg1: i32, %arg2: memref<3x3xi32, #tpu.memory_space<smem>>) -> (i32, i32) {
    %c0_i32 = arith.constant 0 : i32
    %c0_i32_0 = arith.constant 0 : i32
    return %arg0, %c0_i32 : i32, i32
  }
}

</mosaic_0001>

<llo_original>
// kernel: tpu_custom_call.1
$region0: #{tpu_custom_call.1}
  #allocation0 [shape = 'u32[]', space=smem, size = 0x4, offset = 0x4, fixed_abs, tag = 'smem constant byte address 0x4 - core index']
  #allocation1 [shape = 'u32[72,128]{1,0:T(1,128)}', space=vmem, size = 0x9000, scoped, tag = 'internal scratch']
  #allocation2 [shape = 'f32[128,1]{1,0:T(8,128)}', space=vmem, size = 0x10000, scoped, tag = 'scratch operand']
  #allocation3 [shape = 'f32[128,1]{1,0:T(8,128)}', space=vmem, size = 0x10000, scoped, tag = 'scratch operand']
  #allocation4 [shape = 'f32[128,128]{1,0:T(8,128)}', space=vmem, size = 0x10000, scoped, tag = 'scratch operand']
  #allocation5 [shape = 's32[1]{0}', space=sflag, size = 0x4, scoped, tag = 'scoped memory for tpu_custom_call.1']
  #allocation6 [shape = 'u8[2048]{0}', space=smem, size = 0x800, scoped, tag = 'prefetched SMEM operand 0']
  %s0 = inlined_call_operand.hbm [shape: s32[3,3], index: 0, kind: input, shape index: {}]
  %s1 = inlined_call_operand.hbm [shape: f32[384,128], index: 1, kind: input, shape index: {}]
  %s2 = inlined_call_operand.hbm [shape: f32[128,384], index: 2, kind: input, shape index: {}]
  %s3 = inlined_call_operand.hbm [shape: f32[384,128], index: 3, kind: input, shape index: {}]
  %s4 = inlined_call_operand.hbm [shape: s8[384,384], index: 4, kind: input, shape index: {}]
  %s5 = inlined_call_operand.hbm [shape: f32[384,128], index: 5, kind: output, shape index: {0}]
  %s6 = inlined_call_operand.hbm [shape: f32[384,128], index: 6, kind: output, shape index: {1}]
  %7 = xla_tuple %s5, %s6
  %s8 = sld [smem:[#allocation0]]
  $region85: #{tpu_custom_call.1} parent=0
    _
  %s10 = ssub.s32 1, %s8
  %s11 = scalar_select 0, %s10, %s8
  %s13 = sshll.u32 %s0, 4
  %s14 = int_to_ptr.hbm [resolvable:$true] %s13
  %16 = dma.hbm_to_smem %s14, 64, [#allocation6], [#allocation5]
  %18 = dma.done [#allocation5], 64
  %19 = sfence
  $region1: #{tpu_custom_call.1} parent=0
    #allocation7 [shape = 'u8[131072]{0}', space=vmem, size = 0x20000, scoped, tag = 'input window, operand 1']
    #allocation8 [shape = 's32[2]{0}', space=sflag, size = 0x8, scoped, tag = 'scoped memory for tpu_custom_call.1']
    #allocation9 [shape = 's32[2]{0}', space=sflag, size = 0x8, scoped, tag = 'scoped memory for tpu_custom_call.1']
    #allocation10 [shape = 'u8[131072]{0}', space=vmem, size = 0x20000, scoped, tag = 'input window, operand 2']
    #allocation11 [shape = 's32[2]{0}', space=sflag, size = 0x8, scoped, tag = 'scoped memory for tpu_custom_call.1']
    #allocation12 [shape = 'u8[131072]{0}', space=vmem, size = 0x20000, scoped, tag = 'input window, operand 3']
    #allocation13 [shape = 'u8[32768]{0}', space=vmem, size = 0x8000, scoped, tag = 'input window, operand 4']
    #allocation14 [shape = 's32[2]{0}', space=sflag, size = 0x8, scoped, tag = 'scoped memory for tpu_custom_call.1']
    #allocation15 [shape = 'u8[131072]{0}', space=vmem, size = 0x20000, scoped, tag = 'output window, operand 0']
    #allocation16 [shape = 'u8[131072]{0}', space=vmem, size = 0x20000, scoped, tag = 'output window, operand 1']
    #allocation17 [shape = 's32[2]{0}', space=sflag, size = 0x8, scoped, tag = 'scoped memory for tpu_custom_call.1']
    %20 = vsyncpa [#allocation8], 0
    %s21 = scalar_lea.sflag [#allocation8], 1
    %22 = vsyncpa %s21, 0
    %23 = vsyncpa [#allocation11], 0
    %s24 = scalar_lea.sflag [#allocation11], 1
    %25 = vsyncpa %s24, 0
    %26 = vsyncpa [#allocation14], 0
    %s27 = scalar_lea.sflag [#allocation14], 1
    %28 = vsyncpa %s27, 0
    %29 = vsyncpa [#allocation9], 0
    %s30 = scalar_lea.sflag [#allocation9], 1
    %31 = vsyncpa %s30, 0
    %32 = vsyncpa [#allocation17], 0
    %s33 = scalar_lea.sflag [#allocation17], 1
    %34 = vsyncpa %s33, 0
    loop: start=0, step=1, limit=11
    $region2: #{tpu_custom_call.1} parent=1 // loop_pre_header
      _
    $region3: #{tpu_custom_call.1} parent=1 // loop_header
      %s36 = sphi 0, %s40
      %p37 = scmp.ge.s32.totalorder %s36, 11
      %s43 = sphi 0, %s55
      %s44 = sphi 0, %s51
      %s45 = sphi 0, %s43
      %s46 = sphi 0, %s44
      %s47 = sphi 0, %s45
      %s48 = sphi 0, %s46
      %s58 = sphi 0, %s60
      %s61 = sphi 0, %s58
      %s62 = sphi 0, %s61
      %s78 = sphi 0, %s62
      %s84 = sphi 0, %s86
      %s87 = sphi 0, %s84
      %s88 = sphi 0, %s87
      %s104 = sphi 0, %s88
      %s110 = sphi 0, %s112
      %s113 = sphi 0, %s110
      %s114 = sphi 0, %s113
      %s130 = sphi 0, %s114
      %s138 = sphi 0, %s140
      %s141 = sphi 0, %s138
      %s142 = sphi 0, %s141
      %s158 = sphi 0, %s142
      %s164 = sphi 0, %s166
      %s167 = sphi 0, %s164
      %s168 = sphi 0, %s167
      %s184 = sphi 0, %s168
      %s190 = sphi 0, %s192
      %s193 = sphi 0, %s190
      %s194 = sphi 0, %s193
      %s210 = sphi 0, %s194
    $region4: #{tpu_custom_call.1} parent=1 // loop_header_branch
      %39 = sbr.rel (%p37) target = $region8
    $region5: #{tpu_custom_call.1} parent=1 // loop_body
      %s41 = ssub.s32 %s36, 1
      %s42 = ssub.s32 %s36, 2
      %s49 = sadd.s32 1, %s44
      %p50 = scmp.ge.s32.totalorder %s49, 3
      %s51 = scalar_select %p50, 0, %s49
      %s52 = sadd.s32 1, %s43
      %s53 = scalar_select %p50, %s52, %s43
      %p54 = scmp.ge.s32.totalorder %s53, 3
      %s55 = scalar_select %p54, 0, %s53
      %s56 = ssub.s32 %s43, %s55
      %p57 = scmp.eq.s32.totalorder %s56, 0
      %s59 = sadd.s32 %s58, 1
      %s60 = scalar_select %p57, %s58, %s59
      %p63 = pneg %p57
      %p64 = scmp.eq.s32.totalorder %s36, 8
      %p65 = por %p63, %p64
      %p66 = scmp.ne.s32.totalorder %s58, %s61
      %p67 = scmp.eq.s32.totalorder %s36, 0
      %p68 = por %p66, %p67
      %p69 = scmp.ne.s32.totalorder %s58, %s61
      %p70 = scmp.eq.s32.totalorder %s41, 8
      %p71 = por %p69, %p70
      %p72 = scmp.ne.s32.totalorder %s61, %s62
      %p73 = scmp.eq.s32.totalorder %s41, 0
      %p74 = por %p72, %p73
      %p75 = scmp.ne.s32.totalorder %s61, %s62
      %p76 = scmp.eq.s32.totalorder %s42, 8
      %p77 = por %p75, %p76
      %p79 = scmp.ne.s32.totalorder %s62, %s78
      %p80 = scmp.eq.s32.totalorder %s42, 0
      %p81 = por %p79, %p80
      %s82 = ssub.s32 %s44, %s51
      %p83 = scmp.eq.s32.totalorder %s82, 0
      %s85 = sadd.s32 %s84, 1
      %s86 = scalar_select %p83, %s84, %s85
      %p89 = pneg %p83
      %p90 = scmp.eq.s32.totalorder %s36, 8
      %p91 = por %p89, %p90
      %p92 = scmp.ne.s32.totalorder %s84, %s87
      %p93 = scmp.eq.s32.totalorder %s36, 0
      %p94 = por %p92, %p93
      %p95 = scmp.ne.s32.totalorder %s84, %s87
      %p96 = scmp.eq.s32.totalorder %s41, 8
      %p97 = por %p95, %p96
      %p98 = scmp.ne.s32.totalorder %s87, %s88
      %p99 = scmp.eq.s32.totalorder %s41, 0
      %p100 = por %p98, %p99
      %p101 = scmp.ne.s32.totalorder %s87, %s88
      %p102 = scmp.eq.s32.totalorder %s42, 8
      %p103 = por %p101, %p102
      %p105 = scmp.ne.s32.totalorder %s88, %s104
      %p106 = scmp.eq.s32.totalorder %s42, 0
      %p107 = por %p105, %p106
      %s108 = ssub.s32 %s44, %s51
      %p109 = scmp.eq.s32.totalorder %s108, 0
      %s111 = sadd.s32 %s110, 1
      %s112 = scalar_select %p109, %s110, %s111
      %p115 = pneg %p109
      %p116 = scmp.eq.s32.totalorder %s36, 8
      %p117 = por %p115, %p116
      %p118 = scmp.ne.s32.totalorder %s110, %s113
      %p119 = scmp.eq.s32.totalorder %s36, 0
      %p120 = por %p118, %p119
      %p121 = scmp.ne.s32.totalorder %s110, %s113
      %p122 = scmp.eq.s32.totalorder %s41, 8
      %p123 = por %p121, %p122
      %p124 = scmp.ne.s32.totalorder %s113, %s114
      %p125 = scmp.eq.s32.totalorder %s41, 0
      %p126 = por %p124, %p125
      %p127 = scmp.ne.s32.totalorder %s113, %s114
      %p128 = scmp.eq.s32.totalorder %s42, 8
      %p129 = por %p127, %p128
      %p131 = scmp.ne.s32.totalorder %s114, %s130
      %p132 = scmp.eq.s32.totalorder %s42, 0
      %p133 = por %p131, %p132
      %s134 = ssub.s32 %s43, %s55
      %s135 = ssub.s32 %s44, %s51
      %s136 = sor.u32 %s134, %s135
      %p137 = scmp.eq.s32.totalorder %s136, 0
      %s139 = sadd.s32 %s138, 1
      %s140 = scalar_select %p137, %s138, %s139
      %p143 = pneg %p137
      %p144 = scmp.eq.s32.totalorder %s36, 8
      %p145 = por %p143, %p144
      %p146 = scmp.ne.s32.totalorder %s138, %s141
      %p147 = scmp.eq.s32.totalorder %s36, 0
      %p148 = por %p146, %p147
      %p149 = scmp.ne.s32.totalorder %s138, %s141
      %p150 = scmp.eq.s32.totalorder %s41, 8
      %p151 = por %p149, %p150
      %p152 = scmp.ne.s32.totalorder %s141, %s142
      %p153 = scmp.eq.s32.totalorder %s41, 0
      %p154 = por %p152, %p153
      %p155 = scmp.ne.s32.totalorder %s141, %s142
      %p156 = scmp.eq.s32.totalorder %s42, 8
      %p157 = por %p155, %p156
      %p159 = scmp.ne.s32.totalorder %s142, %s158
      %p160 = scmp.eq.s32.totalorder %s42, 0
      %p161 = por %p159, %p160
      %s162 = ssub.s32 %s43, %s55
      %p163 = scmp.eq.s32.totalorder %s162, 0
      %s165 = sadd.s32 %s164, 1
      %s166 = scalar_select %p163, %s164, %s165
      %p169 = pneg %p163
      %p170 = scmp.eq.s32.totalorder %s36, 8
      %p171 = por %p169, %p170
      %p172 = scmp.ne.s32.totalorder %s164, %s167
      %p173 = scmp.eq.s32.totalorder %s36, 0
      %p174 = por %p172, %p173
      %p175 = scmp.ne.s32.totalorder %s164, %s167
      %p176 = scmp.eq.s32.totalorder %s41, 8
      %p177 = por %p175, %p176
      %p178 = scmp.ne.s32.totalorder %s167, %s168
      %p179 = scmp.eq.s32.totalorder %s41, 0
      %p180 = por %p178, %p179
      %p181 = scmp.ne.s32.totalorder %s167, %s168
      %p182 = scmp.eq.s32.totalorder %s42, 8
      %p183 = por %p181, %p182
      %p185 = scmp.ne.s32.totalorder %s168, %s184
      %p186 = scmp.eq.s32.totalorder %s42, 0
      %p187 = por %p185, %p186
      %s188 = ssub.s32 %s43, %s55
      %p189 = scmp.eq.s32.totalorder %s188, 0
      %s191 = sadd.s32 %s190, 1
      %s192 = scalar_select %p189, %s190, %s191
      %p195 = pneg %p189
      %p196 = scmp.eq.s32.totalorder %s36, 8
      %p197 = por %p195, %p196
      %p198 = scmp.ne.s32.totalorder %s190, %s193
      %p199 = scmp.eq.s32.totalorder %s36, 0
      %p200 = por %p198, %p199
      %p201 = scmp.ne.s32.totalorder %s190, %s193
      %p202 = scmp.eq.s32.totalorder %s41, 8
      %p203 = por %p201, %p202
      %p204 = scmp.ne.s32.totalorder %s193, %s194
      %p205 = scmp.eq.s32.totalorder %s41, 0
      %p206 = por %p204, %p205
      %p207 = scmp.ne.s32.totalorder %s193, %s194
      %p208 = scmp.eq.s32.totalorder %s42, 8
      %p209 = por %p207, %p208
      %p211 = scmp.ne.s32.totalorder %s194, %s210
      %p212 = scmp.eq.s32.totalorder %s42, 0
      %p213 = por %p211, %p212
      %p214 = scmp.le.s32.totalorder 1, %s36
      %p215 = scmp.lt.s32.totalorder %s36, 10
      %p216 = pnand %p214, %p215
      %p217 = pneg %p216
      // Predicated region
      $region9: #{tpu_custom_call.1} parent=5 // pred_check
        _
      $region10: #{tpu_custom_call.1} parent=5 // pred_check_branch
        %219 = sbr.rel (%p216) target = $region12
      $region11: #{tpu_custom_call.1} parent=5 // pred_region
        %s220 = ssub.s32 %s36, 1
      $region12: #{tpu_custom_call.1} parent=5 // pred_fallthru
        _
      %p221 = scmp.lt.s32.totalorder %s36, 9
      // Predicated region
      $region13: #{tpu_custom_call.1} parent=5 // pred_check
        %p222 = pneg %p221
      $region14: #{tpu_custom_call.1} parent=5 // pred_check_branch
        %224 = sbr.rel (%p222) target = $region16
      $region15: #{tpu_custom_call.1} parent=5 // pred_region
        // Predicated region
        $region17: #{tpu_custom_call.1} parent=15 // pred_check
          %p225 = pneg %p68
        $region18: #{tpu_custom_call.1} parent=15 // pred_check_branch
          %227 = sbr.rel (%p225) target = $region20
        $region19: #{tpu_custom_call.1} parent=15 // pred_region
          %s228 = sand.u32 %s58, 1
          %s229 = scalar_lea.sflag [#allocation8], %s228
          %s230 = sand.u32 %s58, 1
          %s231 = smul.addr %s230, 128
          %s232 = scalar_lea.vmem [#allocation7], %s231
          %s233 = smul.u32 16, %s43
          %235 = vsyncadd %s229, 0
          %s236 = smul.addr %s233, 8
          %s237 = scalar_lea.hbm %s1, %s236
          %s238 = sshll.u32 %s237, 4
          %s239 = int_to_ptr.hbm [resolvable:$true] %s238
          %s240 = sshll.u32 %s232, 4
          %s241 = int_to_ptr.vmem [resolvable:$true] %s240
          %246 = dma.hbm_to_vmem [thread:$0]  %s239, 2048, %s241, %s229, 128, 128, 8
        $region20: #{tpu_custom_call.1} parent=15 // pred_fallthru
          _
        // Predicated region
        $region21: #{tpu_custom_call.1} parent=15 // pred_check
          %p247 = pneg %p94
        $region22: #{tpu_custom_call.1} parent=15 // pred_check_branch
          %249 = sbr.rel (%p247) target = $region24
        $region23: #{tpu_custom_call.1} parent=15 // pred_region
          %s250 = sand.u32 %s36, 1
          %s251 = scalar_lea.sflag [#allocation11], %s250
          %s252 = sand.u32 %s84, 1
          %s253 = smul.addr %s252, 128
          %s254 = scalar_lea.vmem [#allocation10], %s253
          %256 = vsyncadd %s251, 0
          %s257 = smul.addr %s44, 8
          %s258 = scalar_lea.hbm %s2, %s257
          %s259 = sshll.u32 %s258, 4
          %s260 = int_to_ptr.hbm [resolvable:$true] %s259
          %s261 = sshll.u32 %s254, 4
          %s262 = int_to_ptr.vmem [resolvable:$true] %s261
          %267 = dma.hbm_to_vmem [thread:$0]  %s260, 2048, %s262, %s251, 384, 128, 8
        $region24: #{tpu_custom_call.1} parent=15 // pred_fallthru
          _
        // Predicated region
        $region25: #{tpu_custom_call.1} parent=15 // pred_check
          %p268 = pneg %p120
        $region26: #{tpu_custom_call.1} parent=15 // pred_check_branch
          %270 = sbr.rel (%p268) target = $region28
        $region27: #{tpu_custom_call.1} parent=15 // pred_region
          %s271 = sand.u32 %s36, 1
          %s272 = scalar_lea.sflag [#allocation11], %s271
          %s273 = sand.u32 %s110, 1
          %s274 = smul.addr %s273, 128
          %s275 = scalar_lea.vmem [#allocation12], %s274
          %s276 = smul.u32 16, %s44
          %278 = vsyncadd %s272, 0
          %s279 = smul.addr %s276, 8
          %s280 = scalar_lea.hbm %s3, %s279
          %s281 = sshll.u32 %s280, 4
          %s282 = int_to_ptr.hbm [resolvable:$true] %s281
          %s283 = sshll.u32 %s275, 4
          %s284 = int_to_ptr.vmem [resolvable:$true] %s283
          %289 = dma.hbm_to_vmem [thread:$0]  %s282, 2048, %s284, %s272, 128, 128, 8
        $region28: #{tpu_custom_call.1} parent=15 // pred_fallthru
          _
        // Predicated region
        $region29: #{tpu_custom_call.1} parent=15 // pred_check
          %p290 = pneg %p148
        $region30: #{tpu_custom_call.1} parent=15 // pred_check_branch
          %292 = sbr.rel (%p290) target = $region32
        $region31: #{tpu_custom_call.1} parent=15 // pred_region
          %s293 = sand.u32 %s138, 1
          %s294 = scalar_lea.sflag [#allocation14], %s293
          %s295 = sand.u32 %s138, 1
          %s296 = smul.addr %s295, 32
          %s297 = scalar_lea.vmem [#allocation13], %s296
          %s298 = smul.u32 4, %s43
          %300 = vsyncadd %s294, 0
          %s301 = smul.addr %s298, 3
          %s302 = sadd.s32 %s44, %s301
          %s303 = smul.addr %s302, 8
          %s304 = scalar_lea.hbm %s4, %s303
          %s305 = sshll.u32 %s304, 4
          %s306 = int_to_ptr.hbm [resolvable:$true] %s305
          %s307 = sshll.u32 %s297, 4
          %s308 = int_to_ptr.vmem [resolvable:$true] %s307
          %313 = dma.hbm_to_vmem [thread:$0]  %s306, 512, %s308, %s294, 384, 128, 8
        $region32: #{tpu_custom_call.1} parent=15 // pred_fallthru
          _
      $region16: #{tpu_custom_call.1} parent=5 // pred_fallthru
        _
      %p314 = scmp.le.s32.totalorder 1, %s36
      %p315 = scmp.lt.s32.totalorder %s36, 10
      %p316 = pnand %p314, %p315
      %p317 = pneg %p316
      // Predicated region
      $region33: #{tpu_custom_call.1} parent=5 // pred_check
        _
      $region34: #{tpu_custom_call.1} parent=5 // pred_check_branch
        %319 = sbr.rel (%p316) target = $region36
      $region35: #{tpu_custom_call.1} parent=5 // pred_region
        %s320 = ssub.s32 %s36, 1
        %s321 = sand.u32 %s61, 1
        %s322 = scalar_lea.sflag [#allocation8], %s321
        %s323 = sand.u32 %s61, 1
        %s324 = smul.addr %s323, 128
        %s325 = scalar_lea.vmem [#allocation7], %s324
        // Predicated region
        $region37: #{tpu_custom_call.1} parent=35 // pred_check
          %p326 = pneg %p74
        $region38: #{tpu_custom_call.1} parent=35 // pred_check_branch
          %328 = sbr.rel (%p326) target = $region40
        $region39: #{tpu_custom_call.1} parent=35 // pred_region
          %330 = dma.done %s322, 2048
        $region40: #{tpu_custom_call.1} parent=35 // pred_fallthru
          _
        %s331 = sand.u32 %s41, 1
        %s332 = scalar_lea.sflag [#allocation11], %s331
        %s333 = sand.u32 %s87, 1
        %s334 = smul.addr %s333, 128
        %s335 = scalar_lea.vmem [#allocation10], %s334
        // Predicated region
        $region41: #{tpu_custom_call.1} parent=35 // pred_check
          %p336 = pneg %p100
        $region42: #{tpu_custom_call.1} parent=35 // pred_check_branch
          %338 = sbr.rel (%p336) target = $region44
        $region43: #{tpu_custom_call.1} parent=35 // pred_region
          %340 = dma.done %s332, 2048
        $region44: #{tpu_custom_call.1} parent=35 // pred_fallthru
          _
        %s341 = sand.u32 %s41, 1
        %s342 = scalar_lea.sflag [#allocation11], %s341
        %s343 = sand.u32 %s113, 1
        %s344 = smul.addr %s343, 128
        %s345 = scalar_lea.vmem [#allocation12], %s344
        // Predicated region
        $region45: #{tpu_custom_call.1} parent=35 // pred_check
          %p346 = pneg %p126
        $region46: #{tpu_custom_call.1} parent=35 // pred_check_branch
          %348 = sbr.rel (%p346) target = $region48
        $region47: #{tpu_custom_call.1} parent=35 // pred_region
          %350 = dma.done %s342, 2048
        $region48: #{tpu_custom_call.1} parent=35 // pred_fallthru
          _
        %s351 = sand.u32 %s141, 1
        %s352 = scalar_lea.sflag [#allocation14], %s351
        %s353 = sand.u32 %s141, 1
        %s354 = smul.addr %s353, 32
        %s355 = scalar_lea.vmem [#allocation13], %s354
        // Predicated region
        $region49: #{tpu_custom_call.1} parent=35 // pred_check
          %p356 = pneg %p154
        $region50: #{tpu_custom_call.1} parent=35 // pred_check_branch
          %358 = sbr.rel (%p356) target = $region52
        $region51: #{tpu_custom_call.1} parent=35 // pred_region
          %360 = dma.done %s352, 512
        $region52: #{tpu_custom_call.1} parent=35 // pred_fallthru
          _
        %s361 = sand.u32 %s61, 1
        %s362 = scalar_lea.sflag [#allocation8], %s361
        %s363 = sand.u32 %s61, 1
        %s364 = smul.addr %s363, 128
        %s365 = scalar_lea.vmem [#allocation7], %s364
        %p366 = pneg %p74
        %p367 = pneg %p71
        %s368 = sand.u32 %s41, 1
        %s369 = scalar_lea.sflag [#allocation11], %s368
        %s370 = sand.u32 %s87, 1
        %s371 = smul.addr %s370, 128
        %s372 = scalar_lea.vmem [#allocation10], %s371
        %p373 = pneg %p100
        %p374 = pneg %p97
        %s375 = sand.u32 %s41, 1
        %s376 = scalar_lea.sflag [#allocation11], %s375
        %s377 = sand.u32 %s113, 1
        %s378 = smul.addr %s377, 128
        %s379 = scalar_lea.vmem [#allocation12], %s378
        %p380 = pneg %p126
        %p381 = pneg %p123
        %s382 = sand.u32 %s141, 1
        %s383 = scalar_lea.sflag [#allocation14], %s382
        %s384 = sand.u32 %s141, 1
        %s385 = smul.addr %s384, 32
        %s386 = scalar_lea.vmem [#allocation13], %s385
        %p387 = pneg %p154
        %p388 = pneg %p151
        %p389 = pneg %p180
        %p390 = pneg %p177
        %s391 = sand.u32 %s167, 1
        %s392 = scalar_lea.sflag [#allocation9], %s391
        %s393 = sand.u32 %s167, 1
        %s394 = smul.addr %s393, 128
        %s395 = scalar_lea.vmem [#allocation15], %s394
        %p396 = pneg %p206
        %p397 = pneg %p203
        %s398 = sand.u32 %s193, 1
        %s399 = scalar_lea.sflag [#allocation17], %s398
        %s400 = sand.u32 %s193, 1
        %s401 = smul.addr %s400, 128
        %s402 = scalar_lea.vmem [#allocation16], %s401
        %s403 = smul.u32 16, %s45
        %s404 = smul.u32 16, %s46
        %s405 = smul.u32 4, %s45
        %s406 = smul.u32 16, %s45
        %s407 = smul.u32 16, %s45
        %p408 = scmp.eq.s32.totalorder %s46, 0
        // Predicated region
        $region53: #{tpu_custom_call.1} parent=35 // pred_check
          %p409 = pneg %p408
        $region54: #{tpu_custom_call.1} parent=35 // pred_check_branch
          %411 = sbr.rel (%p409) target = $region56
        $region55: #{tpu_custom_call.1} parent=35 // pred_region
          %vm412 = vcmask 7168
          %413 = vst.msk [vmem:[#allocation2] sm:$0xff] %vm412, -1e+30
          %414 = vst.msk [vmem:[#allocation2 + $0x8] sm:$0xff] %vm412, -1e+30
          %415 = vst.msk [vmem:[#allocation2 + $0x10] sm:$0xff] %vm412, -1e+30
          %416 = vst.msk [vmem:[#allocation2 + $0x18] sm:$0xff] %vm412, -1e+30
          %417 = vst.msk [vmem:[#allocation2 + $0x20] sm:$0xff] %vm412, -1e+30
          %418 = vst.msk [vmem:[#allocation2 + $0x28] sm:$0xff] %vm412, -1e+30
          %419 = vst.msk [vmem:[#allocation2 + $0x30] sm:$0xff] %vm412, -1e+30
          %420 = vst.msk [vmem:[#allocation2 + $0x38] sm:$0xff] %vm412, -1e+30
          %421 = vst.msk [vmem:[#allocation2 + $0x40] sm:$0xff] %vm412, -1e+30
          %422 = vst.msk [vmem:[#allocation2 + $0x48] sm:$0xff] %vm412, -1e+30
          %423 = vst.msk [vmem:[#allocation2 + $0x50] sm:$0xff] %vm412, -1e+30
          %424 = vst.msk [vmem:[#allocation2 + $0x58] sm:$0xff] %vm412, -1e+30
          %425 = vst.msk [vmem:[#allocation2 + $0x60] sm:$0xff] %vm412, -1e+30
          %426 = vst.msk [vmem:[#allocation2 + $0x68] sm:$0xff] %vm412, -1e+30
          %427 = vst.msk [vmem:[#allocation2 + $0x70] sm:$0xff] %vm412, -1e+30
          %428 = vst.msk [vmem:[#allocation2 + $0x78] sm:$0xff] %vm412, -1e+30
          %429 = vst.msk [vmem:[#allocation3] sm:$0xff] %vm412, 0.0
          %430 = vst.msk [vmem:[#allocation3 + $0x8] sm:$0xff] %vm412, 0.0
          %431 = vst.msk [vmem:[#allocation3 + $0x10] sm:$0xff] %vm412, 0.0
          %432 = vst.msk [vmem:[#allocation3 + $0x18] sm:$0xff] %vm412, 0.0
          %433 = vst.msk [vmem:[#allocation3 + $0x20] sm:$0xff] %vm412, 0.0
          %434 = vst.msk [vmem:[#allocation3 + $0x28] sm:$0xff] %vm412, 0.0
          %435 = vst.msk [vmem:[#allocation3 + $0x30] sm:$0xff] %vm412, 0.0
          %436 = vst.msk [vmem:[#allocation3 + $0x38] sm:$0xff] %vm412, 0.0
          %437 = vst.msk [vmem:[#allocation3 + $0x40] sm:$0xff] %vm412, 0.0
          %438 = vst.msk [vmem:[#allocation3 + $0x48] sm:$0xff] %vm412, 0.0
          %439 = vst.msk [vmem:[#allocation3 + $0x50] sm:$0xff] %vm412, 0.0
          %440 = vst.msk [vmem:[#allocation3 + $0x58] sm:$0xff] %vm412, 0.0
          %441 = vst.msk [vmem:[#allocation3 + $0x60] sm:$0xff] %vm412, 0.0
          %442 = vst.msk [vmem:[#allocation3 + $0x68] sm:$0xff] %vm412, 0.0
          %443 = vst.msk [vmem:[#allocation3 + $0x70] sm:$0xff] %vm412, 0.0
          %444 = vst.msk [vmem:[#allocation3 + $0x78] sm:$0xff] %vm412, 0.0
          %445 = vst [vmem:[#allocation4] sm:$0xff] 0.0
          %446 = vst [vmem:[#allocation4 + $0x8] sm:$0xff] 0.0
          %447 = vst [vmem:[#allocation4 + $0x10] sm:$0xff] 0.0
          %448 = vst [vmem:[#allocation4 + $0x18] sm:$0xff] 0.0
          %449 = vst [vmem:[#allocation4 + $0x20] sm:$0xff] 0.0
          %450 = vst [vmem:[#allocation4 + $0x28] sm:$0xff] 0.0
          %451 = vst [vmem:[#allocation4 + $0x30] sm:$0xff] 0.0
          %452 = vst [vmem:[#allocation4 + $0x38] sm:$0xff] 0.0
          %453 = vst [vmem:[#allocation4 + $0x40] sm:$0xff] 0.0
          %454 = vst [vmem:[#allocation4 + $0x48] sm:$0xff] 0.0
          %455 = vst [vmem:[#allocation4 + $0x50] sm:$0xff] 0.0
          %456 = vst [vmem:[#allocation4 + $0x58] sm:$0xff] 0.0
          %457 = vst [vmem:[#allocation4 + $0x60] sm:$0xff] 0.0
          %458 = vst [vmem:[#allocation4 + $0x68] sm:$0xff] 0.0
          %459 = vst [vmem:[#allocation4 + $0x70] sm:$0xff] 0.0
          %460 = vst [vmem:[#allocation4 + $0x78] sm:$0xff] 0.0
        $region56: #{tpu_custom_call.1} parent=35 // pred_fallthru
          _
        %s461 = sshra.s32 %s46, 7
        %s462 = sand.u32 %s46, 127
        %s463 = sadd.s32 %s461, %s45
        %s464 = smul.u32 %s463, 128
        %s465 = sshra.s32 %s46, 7
        %s466 = sand.u32 %s46, 127
        %s467 = sadd.s32 %s464, %s466
        %s468 = sld [smem:[#allocation6 + %s467]]
        %p469 = scmp.gt.s32.totalorder %s468, 0
        // Predicated region
        $region57: #{tpu_custom_call.1} parent=35 // pred_check
          %p470 = pneg %p469
        $region58: #{tpu_custom_call.1} parent=35 // pred_check_branch
          %472 = sbr.rel (%p470) target = $region60
        $region59: #{tpu_custom_call.1} parent=35 // pred_region
          %v473 = vld [vmem:[%s325] sm:$0xff]
          %v474 = vld [vmem:[%s325 + $0x8] sm:$0xff]
          %v475 = vld [vmem:[%s325 + $0x10] sm:$0xff]
          %v476 = vld [vmem:[%s325 + $0x18] sm:$0xff]
          %v477 = vld [vmem:[%s325 + $0x20] sm:$0xff]
          %v478 = vld [vmem:[%s325 + $0x28] sm:$0xff]
          %v479 = vld [vmem:[%s325 + $0x30] sm:$0xff]
          %v480 = vld [vmem:[%s325 + $0x38] sm:$0xff]
          %v481 = vld [vmem:[%s325 + $0x40] sm:$0xff]
          %v482 = vld [vmem:[%s325 + $0x48] sm:$0xff]
          %v483 = vld [vmem:[%s325 + $0x50] sm:$0xff]
          %v484 = vld [vmem:[%s325 + $0x58] sm:$0xff]
          %v485 = vld [vmem:[%s325 + $0x60] sm:$0xff]
          %v486 = vld [vmem:[%s325 + $0x68] sm:$0xff]
          %v487 = vld [vmem:[%s325 + $0x70] sm:$0xff]
          %v488 = vld [vmem:[%s325 + $0x78] sm:$0xff]
          %v489 = vld [vmem:[%s335] sm:$0xff]
          %v490 = vld [vmem:[%s335 + $0x8] sm:$0xff]
          %v491 = vld [vmem:[%s335 + $0x10] sm:$0xff]
          %v492 = vld [vmem:[%s335 + $0x18] sm:$0xff]
          %v493 = vld [vmem:[%s335 + $0x20] sm:$0xff]
          %v494 = vld [vmem:[%s335 + $0x28] sm:$0xff]
          %v495 = vld [vmem:[%s335 + $0x30] sm:$0xff]
          %v496 = vld [vmem:[%s335 + $0x38] sm:$0xff]
          %v497 = vld [vmem:[%s335 + $0x40] sm:$0xff]
          %v498 = vld [vmem:[%s335 + $0x48] sm:$0xff]
          %v499 = vld [vmem:[%s335 + $0x50] sm:$0xff]
          %v500 = vld [vmem:[%s335 + $0x58] sm:$0xff]
          %v501 = vld [vmem:[%s335 + $0x60] sm:$0xff]
          %v502 = vld [vmem:[%s335 + $0x68] sm:$0xff]
          %v503 = vld [vmem:[%s335 + $0x70] sm:$0xff]
          %v504 = vld [vmem:[%s335 + $0x78] sm:$0xff]
          %505 = vmatpush.msra.mxu0 %v504
          %506 = vmatpush.msra.mxu0 %v503
          %507 = vmatpush.msra.mxu0 %v502
          %508 = vmatpush.msra.mxu0 %v501
          %509 = vmatpush.msra.mxu0 %v500
          %510 = vmatpush.msra.mxu0 %v499
          %511 = vmatpush.msra.mxu0 %v498
          %512 = vmatpush.msra.mxu0 %v497
          %513 = vmatpush.msra.mxu0 %v496
          %514 = vmatpush.msra.mxu0 %v495
          %515 = vmatpush.msra.mxu0 %v494
          %516 = vmatpush.msra.mxu0 %v493
          %517 = vmatpush.msra.mxu0 %v492
          %518 = vmatpush.msra.mxu0 %v491
          %519 = vmatpush.msra.mxu0 %v490
          %520 = vmatpush.msra.mxu0 %v489
          %521 = vmatmul.f32.gmra.mxu0 %v473
          %v522 = vpop.f32.mrf.mxu0
          %v523 = vadd.f32 0.0, %v522
          %524 = vmatmul.f32.gmra.mxu0 %v474
          %v525 = vpop.f32.mrf.mxu0
          %v526 = vadd.f32 0.0, %v525
          %527 = vmatmul.f32.gmra.mxu0 %v475
          %v528 = vpop.f32.mrf.mxu0
          %v529 = vadd.f32 0.0, %v528
          %530 = vmatmul.f32.gmra.mxu0 %v476
          %v531 = vpop.f32.mrf.mxu0
          %v532 = vadd.f32 0.0, %v531
          %533 = vmatmul.f32.gmra.mxu0 %v477
          %v534 = vpop.f32.mrf.mxu0
          %v535 = vadd.f32 0.0, %v534
          %536 = vmatmul.f32.gmra.mxu0 %v478
          %v537 = vpop.f32.mrf.mxu0
          %v538 = vadd.f32 0.0, %v537
          %539 = vmatmul.f32.gmra.mxu0 %v479
          %v540 = vpop.f32.mrf.mxu0
          %v541 = vadd.f32 0.0, %v540
          %542 = vmatmul.f32.gmra.mxu0 %v480
          %v543 = vpop.f32.mrf.mxu0
          %v544 = vadd.f32 0.0, %v543
          %545 = vmatmul.f32.gmra.mxu0 %v481
          %v546 = vpop.f32.mrf.mxu0
          %v547 = vadd.f32 0.0, %v546
          %548 = vmatmul.f32.gmra.mxu0 %v482
          %v549 = vpop.f32.mrf.mxu0
          %v550 = vadd.f32 0.0, %v549
          %551 = vmatmul.f32.gmra.mxu0 %v483
          %v552 = vpop.f32.mrf.mxu0
          %v553 = vadd.f32 0.0, %v552
          %554 = vmatmul.f32.gmra.mxu0 %v484
          %v555 = vpop.f32.mrf.mxu0
          %v556 = vadd.f32 0.0, %v555
          %557 = vmatmul.f32.gmra.mxu0 %v485
          %v558 = vpop.f32.mrf.mxu0
          %v559 = vadd.f32 0.0, %v558
          %560 = vmatmul.f32.gmra.mxu0 %v486
          %v561 = vpop.f32.mrf.mxu0
          %v562 = vadd.f32 0.0, %v561
          %563 = vmatmul.f32.gmra.mxu0 %v487
          %v564 = vpop.f32.mrf.mxu0
          %v565 = vadd.f32 0.0, %v564
          %566 = vmatmul.f32.gmra.mxu0 %v488
          %v567 = vpop.f32.mrf.mxu0
          %v568 = vadd.f32 0.0, %v567
          %569 = vdwg.mxu0
          %v570 = vld [vmem:[%s355] sm:$0xff]
          %v571 = vld [vmem:[%s355 + $0x8] sm:$0xff]
          %v572 = vld [vmem:[%s355 + $0x10] sm:$0xff]
          %v573 = vld [vmem:[%s355 + $0x18] sm:$0xff]
          %v574 = vunpack.c.0.s8 %v570
          %v575 = vunpack.c.1.s8 %v570
          %v576 = vunpack.c.2.s8 %v570
          %v577 = vunpack.c.3.s8 %v570
          %v578 = vunpack.c.0.s8 %v571
          %v579 = vunpack.c.1.s8 %v571
          %v580 = vunpack.c.2.s8 %v571
          %v581 = vunpack.c.3.s8 %v571
          %v582 = vunpack.c.0.s8 %v572
          %v583 = vunpack.c.1.s8 %v572
          %v584 = vunpack.c.2.s8 %v572
          %v585 = vunpack.c.3.s8 %v572
          %v586 = vunpack.c.0.s8 %v573
          %v587 = vunpack.c.1.s8 %v573
          %v588 = vunpack.c.2.s8 %v573
          %v589 = vunpack.c.3.s8 %v573
          %v590 = vcvt.s32.f32 %v574
          %v591 = vcvt.s32.f32 %v575
          %v592 = vcvt.s32.f32 %v576
          %v593 = vcvt.s32.f32 %v577
          %v594 = vcvt.s32.f32 %v578
          %v595 = vcvt.s32.f32 %v579
          %v596 = vcvt.s32.f32 %v580
          %v597 = vcvt.s32.f32 %v581
          %v598 = vcvt.s32.f32 %v582
          %v599 = vcvt.s32.f32 %v583
          %v600 = vcvt.s32.f32 %v584
          %v601 = vcvt.s32.f32 %v585
          %v602 = vcvt.s32.f32 %v586
          %v603 = vcvt.s32.f32 %v587
          %v604 = vcvt.s32.f32 %v588
          %v605 = vcvt.s32.f32 %v589
          %vm606 = vcmp.gt.f32.partialorder %v590, 0.0
          %vm607 = vcmp.gt.f32.partialorder %v591, 0.0
          %vm608 = vcmp.gt.f32.partialorder %v592, 0.0
          %vm609 = vcmp.gt.f32.partialorder %v593, 0.0
          %vm610 = vcmp.gt.f32.partialorder %v594, 0.0
          %vm611 = vcmp.gt.f32.partialorder %v595, 0.0
          %vm612 = vcmp.gt.f32.partialorder %v596, 0.0
          %vm613 = vcmp.gt.f32.partialorder %v597, 0.0
          %vm614 = vcmp.gt.f32.partialorder %v598, 0.0
          %vm615 = vcmp.gt.f32.partialorder %v599, 0.0
          %vm616 = vcmp.gt.f32.partialorder %v600, 0.0
          %vm617 = vcmp.gt.f32.partialorder %v601, 0.0
          %vm618 = vcmp.gt.f32.partialorder %v602, 0.0
          %vm619 = vcmp.gt.f32.partialorder %v603, 0.0
          %vm620 = vcmp.gt.f32.partialorder %v604, 0.0
          %vm621 = vcmp.gt.f32.partialorder %v605, 0.0
          %v622 = vsel %vm606, %v523, -1e+30
          %v623 = vsel %vm607, %v526, -1e+30
          %v624 = vsel %vm608, %v529, -1e+30
          %v625 = vsel %vm609, %v532, -1e+30
          %v626 = vsel %vm610, %v535, -1e+30
          %v627 = vsel %vm611, %v538, -1e+30
          %v628 = vsel %vm612, %v541, -1e+30
          %v629 = vsel %vm613, %v544, -1e+30
          %v630 = vsel %vm614, %v547, -1e+30
          %v631 = vsel %vm615, %v550, -1e+30
          %v632 = vsel %vm616, %v553, -1e+30
          %v633 = vsel %vm617, %v556, -1e+30
          %v634 = vsel %vm618, %v559, -1e+30
          %v635 = vsel %vm619, %v562, -1e+30
          %v636 = vsel %vm620, %v565, -1e+30
          %v637 = vsel %vm621, %v568, -1e+30
          %v638 = vld [vmem:[#allocation2] sm:$0xff]
          %v639 = vld [vmem:[#allocation2 + $0x8] sm:$0xff]
          %v640 = vld [vmem:[#allocation2 + $0x10] sm:$0xff]
          %v641 = vld [vmem:[#allocation2 + $0x18] sm:$0xff]
          %v642 = vld [vmem:[#allocation2 + $0x20] sm:$0xff]
          %v643 = vld [vmem:[#allocation2 + $0x28] sm:$0xff]
          %v644 = vld [vmem:[#allocation2 + $0x30] sm:$0xff]
          %v645 = vld [vmem:[#allocation2 + $0x38] sm:$0xff]
          %v646 = vld [vmem:[#allocation2 + $0x40] sm:$0xff]
          %v647 = vld [vmem:[#allocation2 + $0x48] sm:$0xff]
          %v648 = vld [vmem:[#allocation2 + $0x50] sm:$0xff]
          %v649 = vld [vmem:[#allocation2 + $0x58] sm:$0xff]
          %v650 = vld [vmem:[#allocation2 + $0x60] sm:$0xff]
          %v651 = vld [vmem:[#allocation2 + $0x68] sm:$0xff]
          %v652 = vld [vmem:[#allocation2 + $0x70] sm:$0xff]
          %v653 = vld [vmem:[#allocation2 + $0x78] sm:$0xff]
          %654 = vmax.xlane.f32.xlu0 %v622
          %v655 = vpop.xlane.xlu0 %654
          %656 = vmax.xlane.f32.xlu0 %v623
          %v657 = vpop.xlane.xlu0 %656
          %658 = vmax.xlane.f32.xlu0 %v624
          %v659 = vpop.xlane.xlu0 %658
          %660 = vmax.xlane.f32.xlu0 %v625
          %v661 = vpop.xlane.xlu0 %660
          %662 = vmax.xlane.f32.xlu0 %v626
          %v663 = vpop.xlane.xlu0 %662
          %664 = vmax.xlane.f32.xlu0 %v627
          %v665 = vpop.xlane.xlu0 %664
          %666 = vmax.xlane.f32.xlu0 %v628
          %v667 = vpop.xlane.xlu0 %666
          %668 = vmax.xlane.f32.xlu0 %v629
          %v669 = vpop.xlane.xlu0 %668
          %670 = vmax.xlane.f32.xlu0 %v630
          %v671 = vpop.xlane.xlu0 %670
          %672 = vmax.xlane.f32.xlu0 %v631
          %v673 = vpop.xlane.xlu0 %672
          %674 = vmax.xlane.f32.xlu0 %v632
          %v675 = vpop.xlane.xlu0 %674
          %676 = vmax.xlane.f32.xlu0 %v633
          %v677 = vpop.xlane.xlu0 %676
          %678 = vmax.xlane.f32.xlu0 %v634
          %v679 = vpop.xlane.xlu0 %678
          %680 = vmax.xlane.f32.xlu0 %v635
          %v681 = vpop.xlane.xlu0 %680
          %682 = vmax.xlane.f32.xlu0 %v636
          %v683 = vpop.xlane.xlu0 %682
          %684 = vmax.xlane.f32.xlu0 %v637
          %v685 = vpop.xlane.xlu0 %684
          %v686 = vmax.f32 %v638, %v655
          %v687 = vmax.f32 %v639, %v657
          %v688 = vmax.f32 %v640, %v659
          %v689 = vmax.f32 %v641, %v661
          %v690 = vmax.f32 %v642, %v663
          %v691 = vmax.f32 %v643, %v665
          %v692 = vmax.f32 %v644, %v667
          %v693 = vmax.f32 %v645, %v669
          %v694 = vmax.f32 %v646, %v671
          %v695 = vmax.f32 %v647, %v673
          %v696 = vmax.f32 %v648, %v675
          %v697 = vmax.f32 %v649, %v677
          %v698 = vmax.f32 %v650, %v679
          %v699 = vmax.f32 %v651, %v681
          %v700 = vmax.f32 %v652, %v683
          %v701 = vmax.f32 %v653, %v685
          %v702 = vsub.f32 %v638, %v686
          %v703 = vsub.f32 %v639, %v687
          %v704 = vsub.f32 %v640, %v688
          %v705 = vsub.f32 %v641, %v689
          %v706 = vsub.f32 %v642, %v690
          %v707 = vsub.f32 %v643, %v691
          %v708 = vsub.f32 %v644, %v692
          %v709 = vsub.f32 %v645, %v693
          %v710 = vsub.f32 %v646, %v694
          %v711 = vsub.f32 %v647, %v695
          %v712 = vsub.f32 %v648, %v696
          %v713 = vsub.f32 %v649, %v697
          %v714 = vsub.f32 %v650, %v698
          %v715 = vsub.f32 %v651, %v699
          %v716 = vsub.f32 %v652, %v700
          %v717 = vsub.f32 %v653, %v701
          %v718 = vmul.f32 %v702, 1.442695
          %v719 = vpow.pop %v718
          %v720 = vmul.f32 %v703, 1.442695
          %v721 = vpow.pop %v720
          %v722 = vmul.f32 %v704, 1.442695
          %v723 = vpow.pop %v722
          %v724 = vmul.f32 %v705, 1.442695
          %v725 = vpow.pop %v724
          %v726 = vmul.f32 %v706, 1.442695
          %v727 = vpow.pop %v726
          %v728 = vmul.f32 %v707, 1.442695
          %v729 = vpow.pop %v728
          %v730 = vmul.f32 %v708, 1.442695
          %v731 = vpow.pop %v730
          %v732 = vmul.f32 %v709, 1.442695
          %v733 = vpow.pop %v732
          %v734 = vmul.f32 %v710, 1.442695
          %v735 = vpow.pop %v734
          %v736 = vmul.f32 %v711, 1.442695
          %v737 = vpow.pop %v736
          %v738 = vmul.f32 %v712, 1.442695
          %v739 = vpow.pop %v738
          %v740 = vmul.f32 %v713, 1.442695
          %v741 = vpow.pop %v740
          %v742 = vmul.f32 %v714, 1.442695
          %v743 = vpow.pop %v742
          %v744 = vmul.f32 %v715, 1.442695
          %v745 = vpow.pop %v744
          %v746 = vmul.f32 %v716, 1.442695
          %v747 = vpow.pop %v746
          %v748 = vmul.f32 %v717, 1.442695
          %v749 = vpow.pop %v748
          %751 = vset.pattern.permute.xlu0 0
          %752 = vperm.xlu0 %751, %v686
          %v753 = vpop.permute.xlu0 %752
          %756 = vset.pattern.permute.xlu0 0
          %757 = vperm.xlu0 %756, %v687
          %v758 = vpop.permute.xlu0 %757
          %761 = vset.pattern.permute.xlu0 0
          %762 = vperm.xlu0 %761, %v688
          %v763 = vpop.permute.xlu0 %762
          %766 = vset.pattern.permute.xlu0 0
          %767 = vperm.xlu0 %766, %v689
          %v768 = vpop.permute.xlu0 %767
          %771 = vset.pattern.permute.xlu0 0
          %772 = vperm.xlu0 %771, %v690
          %v773 = vpop.permute.xlu0 %772
          %776 = vset.pattern.permute.xlu0 0
          %777 = vperm.xlu0 %776, %v691
          %v778 = vpop.permute.xlu0 %777
          %781 = vset.pattern.permute.xlu0 0
          %782 = vperm.xlu0 %781, %v692
          %v783 = vpop.permute.xlu0 %782
          %786 = vset.pattern.permute.xlu0 0
          %787 = vperm.xlu0 %786, %v693
          %v788 = vpop.permute.xlu0 %787
          %791 = vset.pattern.permute.xlu0 0
          %792 = vperm.xlu0 %791, %v694
          %v793 = vpop.permute.xlu0 %792
          %796 = vset.pattern.permute.xlu0 0
          %797 = vperm.xlu0 %796, %v695
          %v798 = vpop.permute.xlu0 %797
          %801 = vset.pattern.permute.xlu0 0
          %802 = vperm.xlu0 %801, %v696
          %v803 = vpop.permute.xlu0 %802
          %806 = vset.pattern.permute.xlu0 0
          %807 = vperm.xlu0 %806, %v697
          %v808 = vpop.permute.xlu0 %807
          %811 = vset.pattern.permute.xlu0 0
          %812 = vperm.xlu0 %811, %v698
          %v813 = vpop.permute.xlu0 %812
          %816 = vset.pattern.permute.xlu0 0
          %817 = vperm.xlu0 %816, %v699
          %v818 = vpop.permute.xlu0 %817
          %821 = vset.pattern.permute.xlu0 0
          %822 = vperm.xlu0 %821, %v700
          %v823 = vpop.permute.xlu0 %822
          %826 = vset.pattern.permute.xlu0 0
          %827 = vperm.xlu0 %826, %v701
          %v828 = vpop.permute.xlu0 %827
          %v830 = vsub.f32 %v622, %v753
          %v831 = vsub.f32 %v623, %v758
          %v832 = vsub.f32 %v624, %v763
          %v833 = vsub.f32 %v625, %v768
          %v834 = vsub.f32 %v626, %v773
          %v835 = vsub.f32 %v627, %v778
          %v836 = vsub.f32 %v628, %v783
          %v837 = vsub.f32 %v629, %v788
          %v838 = vsub.f32 %v630, %v793
          %v839 = vsub.f32 %v631, %v798
          %v840 = vsub.f32 %v632, %v803
          %v841 = vsub.f32 %v633, %v808
          %v842 = vsub.f32 %v634, %v813
          %v843 = vsub.f32 %v635, %v818
          %v844 = vsub.f32 %v636, %v823
          %v845 = vsub.f32 %v637, %v828
          %v846 = vmul.f32 %v830, 1.442695
          %v847 = vpow.pop %v846
          %v848 = vmul.f32 %v831, 1.442695
          %v849 = vpow.pop %v848
          %v850 = vmul.f32 %v832, 1.442695
          %v851 = vpow.pop %v850
          %v852 = vmul.f32 %v833, 1.442695
          %v853 = vpow.pop %v852
          %v854 = vmul.f32 %v834, 1.442695
          %v855 = vpow.pop %v854
          %v856 = vmul.f32 %v835, 1.442695
          %v857 = vpow.pop %v856
          %v858 = vmul.f32 %v836, 1.442695
          %v859 = vpow.pop %v858
          %v860 = vmul.f32 %v837, 1.442695
          %v861 = vpow.pop %v860
          %v862 = vmul.f32 %v838, 1.442695
          %v863 = vpow.pop %v862
          %v864 = vmul.f32 %v839, 1.442695
          %v865 = vpow.pop %v864
          %v866 = vmul.f32 %v840, 1.442695
          %v867 = vpow.pop %v866
          %v868 = vmul.f32 %v841, 1.442695
          %v869 = vpow.pop %v868
          %v870 = vmul.f32 %v842, 1.442695
          %v871 = vpow.pop %v870
          %v872 = vmul.f32 %v843, 1.442695
          %v873 = vpow.pop %v872
          %v874 = vmul.f32 %v844, 1.442695
          %v875 = vpow.pop %v874
          %v876 = vmul.f32 %v845, 1.442695
          %v877 = vpow.pop %v876
          %v878 = vsel %vm606, %v847, 0.0
          %v879 = vsel %vm607, %v849, 0.0
          %v880 = vsel %vm608, %v851, 0.0
          %v881 = vsel %vm609, %v853, 0.0
          %v882 = vsel %vm610, %v855, 0.0
          %v883 = vsel %vm611, %v857, 0.0
          %v884 = vsel %vm612, %v859, 0.0
          %v885 = vsel %vm613, %v861, 0.0
          %v886 = vsel %vm614, %v863, 0.0
          %v887 = vsel %vm615, %v865, 0.0
          %v888 = vsel %vm616, %v867, 0.0
          %v889 = vsel %vm617, %v869, 0.0
          %v890 = vsel %vm618, %v871, 0.0
          %v891 = vsel %vm619, %v873, 0.0
          %v892 = vsel %vm620, %v875, 0.0
          %v893 = vsel %vm621, %v877, 0.0
          %v894 = vld [vmem:[#allocation3] sm:$0xff]
          %v895 = vld [vmem:[#allocation3 + $0x8] sm:$0xff]
          %v896 = vld [vmem:[#allocation3 + $0x10] sm:$0xff]
          %v897 = vld [vmem:[#allocation3 + $0x18] sm:$0xff]
          %v898 = vld [vmem:[#allocation3 + $0x20] sm:$0xff]
          %v899 = vld [vmem:[#allocation3 + $0x28] sm:$0xff]
          %v900 = vld [vmem:[#allocation3 + $0x30] sm:$0xff]
          %v901 = vld [vmem:[#allocation3 + $0x38] sm:$0xff]
          %v902 = vld [vmem:[#allocation3 + $0x40] sm:$0xff]
          %v903 = vld [vmem:[#allocation3 + $0x48] sm:$0xff]
          %v904 = vld [vmem:[#allocation3 + $0x50] sm:$0xff]
          %v905 = vld [vmem:[#allocation3 + $0x58] sm:$0xff]
          %v906 = vld [vmem:[#allocation3 + $0x60] sm:$0xff]
          %v907 = vld [vmem:[#allocation3 + $0x68] sm:$0xff]
          %v908 = vld [vmem:[#allocation3 + $0x70] sm:$0xff]
          %v909 = vld [vmem:[#allocation3 + $0x78] sm:$0xff]
          %v910 = vmul.f32 %v719, %v894
          %v911 = vmul.f32 %v721, %v895
          %v912 = vmul.f32 %v723, %v896
          %v913 = vmul.f32 %v725, %v897
          %v914 = vmul.f32 %v727, %v898
          %v915 = vmul.f32 %v729, %v899
          %v916 = vmul.f32 %v731, %v900
          %v917 = vmul.f32 %v733, %v901
          %v918 = vmul.f32 %v735, %v902
          %v919 = vmul.f32 %v737, %v903
          %v920 = vmul.f32 %v739, %v904
          %v921 = vmul.f32 %v741, %v905
          %v922 = vmul.f32 %v743, %v906
          %v923 = vmul.f32 %v745, %v907
          %v924 = vmul.f32 %v747, %v908
          %v925 = vmul.f32 %v749, %v909
          %926 = vadd.xlane.f32.xlu0 %v878
          %v927 = vpop.xlane.xlu0 %926
          %928 = vadd.xlane.f32.xlu0 %v879
          %v929 = vpop.xlane.xlu0 %928
          %930 = vadd.xlane.f32.xlu0 %v880
          %v931 = vpop.xlane.xlu0 %930
          %932 = vadd.xlane.f32.xlu0 %v881
          %v933 = vpop.xlane.xlu0 %932
          %934 = vadd.xlane.f32.xlu0 %v882
          %v935 = vpop.xlane.xlu0 %934
          %936 = vadd.xlane.f32.xlu0 %v883
          %v937 = vpop.xlane.xlu0 %936
          %938 = vadd.xlane.f32.xlu0 %v884
          %v939 = vpop.xlane.xlu0 %938
          %940 = vadd.xlane.f32.xlu0 %v885
          %v941 = vpop.xlane.xlu0 %940
          %942 = vadd.xlane.f32.xlu0 %v886
          %v943 = vpop.xlane.xlu0 %942
          %944 = vadd.xlane.f32.xlu0 %v887
          %v945 = vpop.xlane.xlu0 %944
          %946 = vadd.xlane.f32.xlu0 %v888
          %v947 = vpop.xlane.xlu0 %946
          %948 = vadd.xlane.f32.xlu0 %v889
          %v949 = vpop.xlane.xlu0 %948
          %950 = vadd.xlane.f32.xlu0 %v890
          %v951 = vpop.xlane.xlu0 %950
          %952 = vadd.xlane.f32.xlu0 %v891
          %v953 = vpop.xlane.xlu0 %952
          %954 = vadd.xlane.f32.xlu0 %v892
          %v955 = vpop.xlane.xlu0 %954
          %956 = vadd.xlane.f32.xlu0 %v893
          %v957 = vpop.xlane.xlu0 %956
          %v958 = vadd.f32 %v910, %v927
          %v959 = vadd.f32 %v911, %v929
          %v960 = vadd.f32 %v912, %v931
          %v961 = vadd.f32 %v913, %v933
          %v962 = vadd.f32 %v914, %v935
          %v963 = vadd.f32 %v915, %v937
          %v964 = vadd.f32 %v916, %v939
          %v965 = vadd.f32 %v917, %v941
          %v966 = vadd.f32 %v918, %v943
          %v967 = vadd.f32 %v919, %v945
          %v968 = vadd.f32 %v920, %v947
          %v969 = vadd.f32 %v921, %v949
          %v970 = vadd.f32 %v922, %v951
          %v971 = vadd.f32 %v923, %v953
          %v972 = vadd.f32 %v924, %v955
          %v973 = vadd.f32 %v925, %v957
          %vm974 = vcmask 7168
          %975 = vst.msk [vmem:[#allocation3] sm:$0xff] %vm974, %v958
          %976 = vst.msk [vmem:[#allocation3 + $0x8] sm:$0xff] %vm974, %v959
          %977 = vst.msk [vmem:[#allocation3 + $0x10] sm:$0xff] %vm974, %v960
          %978 = vst.msk [vmem:[#allocation3 + $0x18] sm:$0xff] %vm974, %v961
          %979 = vst.msk [vmem:[#allocation3 + $0x20] sm:$0xff] %vm974, %v962
          %980 = vst.msk [vmem:[#allocation3 + $0x28] sm:$0xff] %vm974, %v963
          %981 = vst.msk [vmem:[#allocation3 + $0x30] sm:$0xff] %vm974, %v964
          %982 = vst.msk [vmem:[#allocation3 + $0x38] sm:$0xff] %vm974, %v965
          %983 = vst.msk [vmem:[#allocation3 + $0x40] sm:$0xff] %vm974, %v966
          %984 = vst.msk [vmem:[#allocation3 + $0x48] sm:$0xff] %vm974, %v967
          %985 = vst.msk [vmem:[#allocation3 + $0x50] sm:$0xff] %vm974, %v968
          %986 = vst.msk [vmem:[#allocation3 + $0x58] sm:$0xff] %vm974, %v969
          %987 = vst.msk [vmem:[#allocation3 + $0x60] sm:$0xff] %vm974, %v970
          %988 = vst.msk [vmem:[#allocation3 + $0x68] sm:$0xff] %vm974, %v971
          %989 = vst.msk [vmem:[#allocation3 + $0x70] sm:$0xff] %vm974, %v972
          %990 = vst.msk [vmem:[#allocation3 + $0x78] sm:$0xff] %vm974, %v973
          %v991 = vld [vmem:[%s345] sm:$0xff]
          %v992 = vld [vmem:[%s345 + $0x8] sm:$0xff]
          %v993 = vld [vmem:[%s345 + $0x10] sm:$0xff]
          %v994 = vld [vmem:[%s345 + $0x18] sm:$0xff]
          %v995 = vld [vmem:[%s345 + $0x20] sm:$0xff]
          %v996 = vld [vmem:[%s345 + $0x28] sm:$0xff]
          %v997 = vld [vmem:[%s345 + $0x30] sm:$0xff]
          %v998 = vld [vmem:[%s345 + $0x38] sm:$0xff]
          %v999 = vld [vmem:[%s345 + $0x40] sm:$0xff]
          %v1000 = vld [vmem:[%s345 + $0x48] sm:$0xff]
          %v1001 = vld [vmem:[%s345 + $0x50] sm:$0xff]
          %v1002 = vld [vmem:[%s345 + $0x58] sm:$0xff]
          %v1003 = vld [vmem:[%s345 + $0x60] sm:$0xff]
          %v1004 = vld [vmem:[%s345 + $0x68] sm:$0xff]
          %v1005 = vld [vmem:[%s345 + $0x70] sm:$0xff]
          %v1006 = vld [vmem:[%s345 + $0x78] sm:$0xff]
          %v1007 = vld [vmem:[#allocation4] sm:$0xff]
          %v1008 = vld [vmem:[#allocation4 + $0x8] sm:$0xff]
          %v1009 = vld [vmem:[#allocation4 + $0x10] sm:$0xff]
          %v1010 = vld [vmem:[#allocation4 + $0x18] sm:$0xff]
          %v1011 = vld [vmem:[#allocation4 + $0x20] sm:$0xff]
          %v1012 = vld [vmem:[#allocation4 + $0x28] sm:$0xff]
          %v1013 = vld [vmem:[#allocation4 + $0x30] sm:$0xff]
          %v1014 = vld [vmem:[#allocation4 + $0x38] sm:$0xff]
          %v1015 = vld [vmem:[#allocation4 + $0x40] sm:$0xff]
          %v1016 = vld [vmem:[#allocation4 + $0x48] sm:$0xff]
          %v1017 = vld [vmem:[#allocation4 + $0x50] sm:$0xff]
          %v1018 = vld [vmem:[#allocation4 + $0x58] sm:$0xff]
          %v1019 = vld [vmem:[#allocation4 + $0x60] sm:$0xff]
          %v1020 = vld [vmem:[#allocation4 + $0x68] sm:$0xff]
          %v1021 = vld [vmem:[#allocation4 + $0x70] sm:$0xff]
          %v1022 = vld [vmem:[#allocation4 + $0x78] sm:$0xff]
          %1024 = vset.pattern.permute.xlu0 0
          %1025 = vperm.xlu0 %1024, %v719
          %v1026 = vpop.permute.xlu0 %1025
          %1029 = vset.pattern.permute.xlu0 0
          %1030 = vperm.xlu0 %1029, %v721
          %v1031 = vpop.permute.xlu0 %1030
          %1034 = vset.pattern.permute.xlu0 0
          %1035 = vperm.xlu0 %1034, %v723
          %v1036 = vpop.permute.xlu0 %1035
          %1039 = vset.pattern.permute.xlu0 0
          %1040 = vperm.xlu0 %1039, %v725
          %v1041 = vpop.permute.xlu0 %1040
          %1044 = vset.pattern.permute.xlu0 0
          %1045 = vperm.xlu0 %1044, %v727
          %v1046 = vpop.permute.xlu0 %1045
          %1049 = vset.pattern.permute.xlu0 0
          %1050 = vperm.xlu0 %1049, %v729
          %v1051 = vpop.permute.xlu0 %1050
          %1054 = vset.pattern.permute.xlu0 0
          %1055 = vperm.xlu0 %1054, %v731
          %v1056 = vpop.permute.xlu0 %1055
          %1059 = vset.pattern.permute.xlu0 0
          %1060 = vperm.xlu0 %1059, %v733
          %v1061 = vpop.permute.xlu0 %1060
          %1064 = vset.pattern.permute.xlu0 0
          %1065 = vperm.xlu0 %1064, %v735
          %v1066 = vpop.permute.xlu0 %1065
          %1069 = vset.pattern.permute.xlu0 0
          %1070 = vperm.xlu0 %1069, %v737
          %v1071 = vpop.permute.xlu0 %1070
          %1074 = vset.pattern.permute.xlu0 0
          %1075 = vperm.xlu0 %1074, %v739
          %v1076 = vpop.permute.xlu0 %1075
          %1079 = vset.pattern.permute.xlu0 0
          %1080 = vperm.xlu0 %1079, %v741
          %v1081 = vpop.permute.xlu0 %1080
          %1084 = vset.pattern.permute.xlu0 0
          %1085 = vperm.xlu0 %1084, %v743
          %v1086 = vpop.permute.xlu0 %1085
          %1089 = vset.pattern.permute.xlu0 0
          %1090 = vperm.xlu0 %1089, %v745
          %v1091 = vpop.permute.xlu0 %1090
          %1094 = vset.pattern.permute.xlu0 0
          %1095 = vperm.xlu0 %1094, %v747
          %v1096 = vpop.permute.xlu0 %1095
          %1099 = vset.pattern.permute.xlu0 0
          %1100 = vperm.xlu0 %1099, %v749
          %v1101 = vpop.permute.xlu0 %1100
          %v1103 = vmul.f32 %v1026, %v1007
          %v1104 = vmul.f32 %v1031, %v1008
          %v1105 = vmul.f32 %v1036, %v1009
          %v1106 = vmul.f32 %v1041, %v1010
          %v1107 = vmul.f32 %v1046, %v1011
          %v1108 = vmul.f32 %v1051, %v1012
          %v1109 = vmul.f32 %v1056, %v1013
          %v1110 = vmul.f32 %v1061, %v1014
          %v1111 = vmul.f32 %v1066, %v1015
          %v1112 = vmul.f32 %v1071, %v1016
          %v1113 = vmul.f32 %v1076, %v1017
          %v1114 = vmul.f32 %v1081, %v1018
          %v1115 = vmul.f32 %v1086, %v1019
          %v1116 = vmul.f32 %v1091, %v1020
          %v1117 = vmul.f32 %v1096, %v1021
          %v1118 = vmul.f32 %v1101, %v1022
          %1119 = vmatpush.msra.mxu0 %v1006
          %1120 = vmatpush.msra.mxu0 %v1005
          %1121 = vmatpush.msra.mxu0 %v1004
          %1122 = vmatpush.msra.mxu0 %v1003
          %1123 = vmatpush.msra.mxu0 %v1002
          %1124 = vmatpush.msra.mxu0 %v1001
          %1125 = vmatpush.msra.mxu0 %v1000
          %1126 = vmatpush.msra.mxu0 %v999
          %1127 = vmatpush.msra.mxu0 %v998
          %1128 = vmatpush.msra.mxu0 %v997
          %1129 = vmatpush.msra.mxu0 %v996
          %1130 = vmatpush.msra.mxu0 %v995
          %1131 = vmatpush.msra.mxu0 %v994
          %1132 = vmatpush.msra.mxu0 %v993
          %1133 = vmatpush.msra.mxu0 %v992
          %1134 = vmatpush.msra.mxu0 %v991
          %1135 = vmatmul.f32.gmra.mxu0 %v878
          %v1136 = vpop.f32.mrf.mxu0
          %v1137 = vadd.f32 0.0, %v1136
          %1138 = vmatmul.f32.gmra.mxu0 %v879
          %v1139 = vpop.f32.mrf.mxu0
          %v1140 = vadd.f32 0.0, %v1139
          %1141 = vmatmul.f32.gmra.mxu0 %v880
          %v1142 = vpop.f32.mrf.mxu0
          %v1143 = vadd.f32 0.0, %v1142
          %1144 = vmatmul.f32.gmra.mxu0 %v881
          %v1145 = vpop.f32.mrf.mxu0
          %v1146 = vadd.f32 0.0, %v1145
          %1147 = vmatmul.f32.gmra.mxu0 %v882
          %v1148 = vpop.f32.mrf.mxu0
          %v1149 = vadd.f32 0.0, %v1148
          %1150 = vmatmul.f32.gmra.mxu0 %v883
          %v1151 = vpop.f32.mrf.mxu0
          %v1152 = vadd.f32 0.0, %v1151
          %1153 = vmatmul.f32.gmra.mxu0 %v884
          %v1154 = vpop.f32.mrf.mxu0
          %v1155 = vadd.f32 0.0, %v1154
          %1156 = vmatmul.f32.gmra.mxu0 %v885
          %v1157 = vpop.f32.mrf.mxu0
          %v1158 = vadd.f32 0.0, %v1157
          %1159 = vmatmul.f32.gmra.mxu0 %v886
          %v1160 = vpop.f32.mrf.mxu0
          %v1161 = vadd.f32 0.0, %v1160
          %1162 = vmatmul.f32.gmra.mxu0 %v887
          %v1163 = vpop.f32.mrf.mxu0
          %v1164 = vadd.f32 0.0, %v1163
          %1165 = vmatmul.f32.gmra.mxu0 %v888
          %v1166 = vpop.f32.mrf.mxu0
          %v1167 = vadd.f32 0.0, %v1166
          %1168 = vmatmul.f32.gmra.mxu0 %v889
          %v1169 = vpop.f32.mrf.mxu0
          %v1170 = vadd.f32 0.0, %v1169
          %1171 = vmatmul.f32.gmra.mxu0 %v890
          %v1172 = vpop.f32.mrf.mxu0
          %v1173 = vadd.f32 0.0, %v1172
          %1174 = vmatmul.f32.gmra.mxu0 %v891
          %v1175 = vpop.f32.mrf.mxu0
          %v1176 = vadd.f32 0.0, %v1175
          %1177 = vmatmul.f32.gmra.mxu0 %v892
          %v1178 = vpop.f32.mrf.mxu0
          %v1179 = vadd.f32 0.0, %v1178
          %1180 = vmatmul.f32.gmra.mxu0 %v893
          %v1181 = vpop.f32.mrf.mxu0
          %v1182 = vadd.f32 0.0, %v1181
          %1183 = vdwg.mxu0
          %v1184 = vadd.f32 %v1103, %v1137
          %v1185 = vadd.f32 %v1104, %v1140
          %v1186 = vadd.f32 %v1105, %v1143
          %v1187 = vadd.f32 %v1106, %v1146
          %v1188 = vadd.f32 %v1107, %v1149
          %v1189 = vadd.f32 %v1108, %v1152
          %v1190 = vadd.f32 %v1109, %v1155
          %v1191 = vadd.f32 %v1110, %v1158
          %v1192 = vadd.f32 %v1111, %v1161
          %v1193 = vadd.f32 %v1112, %v1164
          %v1194 = vadd.f32 %v1113, %v1167
          %v1195 = vadd.f32 %v1114, %v1170
          %v1196 = vadd.f32 %v1115, %v1173
          %v1197 = vadd.f32 %v1116, %v1176
          %v1198 = vadd.f32 %v1117, %v1179
          %v1199 = vadd.f32 %v1118, %v1182
          %1200 = vst [vmem:[#allocation4] sm:$0xff] %v1184
          %1201 = vst [vmem:[#allocation4 + $0x8] sm:$0xff] %v1185
          %1202 = vst [vmem:[#allocation4 + $0x10] sm:$0xff] %v1186
          %1203 = vst [vmem:[#allocation4 + $0x18] sm:$0xff] %v1187
          %1204 = vst [vmem:[#allocation4 + $0x20] sm:$0xff] %v1188
          %1205 = vst [vmem:[#allocation4 + $0x28] sm:$0xff] %v1189
          %1206 = vst [vmem:[#allocation4 + $0x30] sm:$0xff] %v1190
          %1207 = vst [vmem:[#allocation4 + $0x38] sm:$0xff] %v1191
          %1208 = vst [vmem:[#allocation4 + $0x40] sm:$0xff] %v1192
          %1209 = vst [vmem:[#allocation4 + $0x48] sm:$0xff] %v1193
          %1210 = vst [vmem:[#allocation4 + $0x50] sm:$0xff] %v1194
          %1211 = vst [vmem:[#allocation4 + $0x58] sm:$0xff] %v1195
          %1212 = vst [vmem:[#allocation4 + $0x60] sm:$0xff] %v1196
          %1213 = vst [vmem:[#allocation4 + $0x68] sm:$0xff] %v1197
          %1214 = vst [vmem:[#allocation4 + $0x70] sm:$0xff] %v1198
          %1215 = vst [vmem:[#allocation4 + $0x78] sm:$0xff] %v1199
          %1216 = vst.msk [vmem:[#allocation2] sm:$0xff] %vm974, %v686
          %1217 = vst.msk [vmem:[#allocation2 + $0x8] sm:$0xff] %vm974, %v687
          %1218 = vst.msk [vmem:[#allocation2 + $0x10] sm:$0xff] %vm974, %v688
          %1219 = vst.msk [vmem:[#allocation2 + $0x18] sm:$0xff] %vm974, %v689
          %1220 = vst.msk [vmem:[#allocation2 + $0x20] sm:$0xff] %vm974, %v690
          %1221 = vst.msk [vmem:[#allocation2 + $0x28] sm:$0xff] %vm974, %v691
          %1222 = vst.msk [vmem:[#allocation2 + $0x30] sm:$0xff] %vm974, %v692
          %1223 = vst.msk [vmem:[#allocation2 + $0x38] sm:$0xff] %vm974, %v693
          %1224 = vst.msk [vmem:[#allocation2 + $0x40] sm:$0xff] %vm974, %v694
          %1225 = vst.msk [vmem:[#allocation2 + $0x48] sm:$0xff] %vm974, %v695
          %1226 = vst.msk [vmem:[#allocation2 + $0x50] sm:$0xff] %vm974, %v696
          %1227 = vst.msk [vmem:[#allocation2 + $0x58] sm:$0xff] %vm974, %v697
          %1228 = vst.msk [vmem:[#allocation2 + $0x60] sm:$0xff] %vm974, %v698
          %1229 = vst.msk [vmem:[#allocation2 + $0x68] sm:$0xff] %vm974, %v699
          %1230 = vst.msk [vmem:[#allocation2 + $0x70] sm:$0xff] %vm974, %v700
          %1231 = vst.msk [vmem:[#allocation2 + $0x78] sm:$0xff] %vm974, %v701
        $region60: #{tpu_custom_call.1} parent=35 // pred_fallthru
          _
        %p1232 = scmp.eq.s32.totalorder %s46, 2
        // Predicated region
        $region61: #{tpu_custom_call.1} parent=35 // pred_check
          %p1233 = pneg %p1232
        $region62: #{tpu_custom_call.1} parent=35 // pred_check_branch
          %1235 = sbr.rel (%p1233) target = $region64
        $region63: #{tpu_custom_call.1} parent=35 // pred_region
          %v1236 = vld [vmem:[#allocation4] sm:$0xff]
          %v1237 = vld [vmem:[#allocation4 + $0x8] sm:$0xff]
          %v1238 = vld [vmem:[#allocation4 + $0x10] sm:$0xff]
          %v1239 = vld [vmem:[#allocation4 + $0x18] sm:$0xff]
          %v1240 = vld [vmem:[#allocation4 + $0x20] sm:$0xff]
          %v1241 = vld [vmem:[#allocation4 + $0x28] sm:$0xff]
          %v1242 = vld [vmem:[#allocation4 + $0x30] sm:$0xff]
          %v1243 = vld [vmem:[#allocation4 + $0x38] sm:$0xff]
          %v1244 = vld [vmem:[#allocation4 + $0x40] sm:$0xff]
          %v1245 = vld [vmem:[#allocation4 + $0x48] sm:$0xff]
          %v1246 = vld [vmem:[#allocation4 + $0x50] sm:$0xff]
          %v1247 = vld [vmem:[#allocation4 + $0x58] sm:$0xff]
          %v1248 = vld [vmem:[#allocation4 + $0x60] sm:$0xff]
          %v1249 = vld [vmem:[#allocation4 + $0x68] sm:$0xff]
          %v1250 = vld [vmem:[#allocation4 + $0x70] sm:$0xff]
          %v1251 = vld [vmem:[#allocation4 + $0x78] sm:$0xff]
          %v1252 = vld [vmem:[#allocation3] sm:$0xff]
          %v1253 = vld [vmem:[#allocation3 + $0x8] sm:$0xff]
          %v1254 = vld [vmem:[#allocation3 + $0x10] sm:$0xff]
          %v1255 = vld [vmem:[#allocation3 + $0x18] sm:$0xff]
          %v1256 = vld [vmem:[#allocation3 + $0x20] sm:$0xff]
          %v1257 = vld [vmem:[#allocation3 + $0x28] sm:$0xff]
          %v1258 = vld [vmem:[#allocation3 + $0x30] sm:$0xff]
          %v1259 = vld [vmem:[#allocation3 + $0x38] sm:$0xff]
          %v1260 = vld [vmem:[#allocation3 + $0x40] sm:$0xff]
          %v1261 = vld [vmem:[#allocation3 + $0x48] sm:$0xff]
          %v1262 = vld [vmem:[#allocation3 + $0x50] sm:$0xff]
          %v1263 = vld [vmem:[#allocation3 + $0x58] sm:$0xff]
          %v1264 = vld [vmem:[#allocation3 + $0x60] sm:$0xff]
          %v1265 = vld [vmem:[#allocation3 + $0x68] sm:$0xff]
          %v1266 = vld [vmem:[#allocation3 + $0x70] sm:$0xff]
          %v1267 = vld [vmem:[#allocation3 + $0x78] sm:$0xff]
          %v1268 = vrcp.pop %v1252
          %v1269 = vmul.f32 %v1252, %v1268
          %v1270 = vsub.f32 1.0, %v1269
          %v1271 = vmul.f32 %v1268, %v1270
          %v1272 = vadd.f32 %v1268, %v1271
          %vm1273 = vweird.f32 %v1252
          %vm1274 = vweird.f32 %v1268
          %vm1275 = vmor %vm1273, %vm1274
          %v1276 = vsel %vm1275, %v1268, %v1272
          %v1277 = vand.u32 2147483647, %v1252
          %vm1278 = vcmp.eq.f32.partialorder %v1277, 8.507059e+37
          %v1279 = vand.u32 %v1252, 2147483648
          %v1280 = vor.u32 1.1754944e-38, %v1279
          %v1281 = vsel %vm1278, %v1280, %v1276
          %v1282 = vrcp.pop %v1253
          %v1283 = vmul.f32 %v1253, %v1282
          %v1284 = vsub.f32 1.0, %v1283
          %v1285 = vmul.f32 %v1282, %v1284
          %v1286 = vadd.f32 %v1282, %v1285
          %vm1287 = vweird.f32 %v1253
          %vm1288 = vweird.f32 %v1282
          %vm1289 = vmor %vm1287, %vm1288
          %v1290 = vsel %vm1289, %v1282, %v1286
          %v1291 = vand.u32 2147483647, %v1253
          %vm1292 = vcmp.eq.f32.partialorder %v1291, 8.507059e+37
          %v1293 = vand.u32 %v1253, 2147483648
          %v1294 = vor.u32 1.1754944e-38, %v1293
          %v1295 = vsel %vm1292, %v1294, %v1290
          %v1296 = vrcp.pop %v1254
          %v1297 = vmul.f32 %v1254, %v1296
          %v1298 = vsub.f32 1.0, %v1297
          %v1299 = vmul.f32 %v1296, %v1298
          %v1300 = vadd.f32 %v1296, %v1299
          %vm1301 = vweird.f32 %v1254
          %vm1302 = vweird.f32 %v1296
          %vm1303 = vmor %vm1301, %vm1302
          %v1304 = vsel %vm1303, %v1296, %v1300
          %v1305 = vand.u32 2147483647, %v1254
          %vm1306 = vcmp.eq.f32.partialorder %v1305, 8.507059e+37
          %v1307 = vand.u32 %v1254, 2147483648
          %v1308 = vor.u32 1.1754944e-38, %v1307
          %v1309 = vsel %vm1306, %v1308, %v1304
          %v1310 = vrcp.pop %v1255
          %v1311 = vmul.f32 %v1255, %v1310
          %v1312 = vsub.f32 1.0, %v1311
          %v1313 = vmul.f32 %v1310, %v1312
          %v1314 = vadd.f32 %v1310, %v1313
          %vm1315 = vweird.f32 %v1255
          %vm1316 = vweird.f32 %v1310
          %vm1317 = vmor %vm1315, %vm1316
          %v1318 = vsel %vm1317, %v1310, %v1314
          %v1319 = vand.u32 2147483647, %v1255
          %vm1320 = vcmp.eq.f32.partialorder %v1319, 8.507059e+37
          %v1321 = vand.u32 %v1255, 2147483648
          %v1322 = vor.u32 1.1754944e-38, %v1321
          %v1323 = vsel %vm1320, %v1322, %v1318
          %v1324 = vrcp.pop %v1256
          %v1325 = vmul.f32 %v1256, %v1324
          %v1326 = vsub.f32 1.0, %v1325
          %v1327 = vmul.f32 %v1324, %v1326
          %v1328 = vadd.f32 %v1324, %v1327
          %vm1329 = vweird.f32 %v1256
          %vm1330 = vweird.f32 %v1324
          %vm1331 = vmor %vm1329, %vm1330
          %v1332 = vsel %vm1331, %v1324, %v1328
          %v1333 = vand.u32 2147483647, %v1256
          %vm1334 = vcmp.eq.f32.partialorder %v1333, 8.507059e+37
          %v1335 = vand.u32 %v1256, 2147483648
          %v1336 = vor.u32 1.1754944e-38, %v1335
          %v1337 = vsel %vm1334, %v1336, %v1332
          %v1338 = vrcp.pop %v1257
          %v1339 = vmul.f32 %v1257, %v1338
          %v1340 = vsub.f32 1.0, %v1339
          %v1341 = vmul.f32 %v1338, %v1340
          %v1342 = vadd.f32 %v1338, %v1341
          %vm1343 = vweird.f32 %v1257
          %vm1344 = vweird.f32 %v1338
          %vm1345 = vmor %vm1343, %vm1344
          %v1346 = vsel %vm1345, %v1338, %v1342
          %v1347 = vand.u32 2147483647, %v1257
          %vm1348 = vcmp.eq.f32.partialorder %v1347, 8.507059e+37
          %v1349 = vand.u32 %v1257, 2147483648
          %v1350 = vor.u32 1.1754944e-38, %v1349
          %v1351 = vsel %vm1348, %v1350, %v1346
          %v1352 = vrcp.pop %v1258
          %v1353 = vmul.f32 %v1258, %v1352
          %v1354 = vsub.f32 1.0, %v1353
          %v1355 = vmul.f32 %v1352, %v1354
          %v1356 = vadd.f32 %v1352, %v1355
          %vm1357 = vweird.f32 %v1258
          %vm1358 = vweird.f32 %v1352
          %vm1359 = vmor %vm1357, %vm1358
          %v1360 = vsel %vm1359, %v1352, %v1356
          %v1361 = vand.u32 2147483647, %v1258
          %vm1362 = vcmp.eq.f32.partialorder %v1361, 8.507059e+37
          %v1363 = vand.u32 %v1258, 2147483648
          %v1364 = vor.u32 1.1754944e-38, %v1363
          %v1365 = vsel %vm1362, %v1364, %v1360
          %v1366 = vrcp.pop %v1259
          %v1367 = vmul.f32 %v1259, %v1366
          %v1368 = vsub.f32 1.0, %v1367
          %v1369 = vmul.f32 %v1366, %v1368
          %v1370 = vadd.f32 %v1366, %v1369
          %vm1371 = vweird.f32 %v1259
          %vm1372 = vweird.f32 %v1366
          %vm1373 = vmor %vm1371, %vm1372
          %v1374 = vsel %vm1373, %v1366, %v1370
          %v1375 = vand.u32 2147483647, %v1259
          %vm1376 = vcmp.eq.f32.partialorder %v1375, 8.507059e+37
          %v1377 = vand.u32 %v1259, 2147483648
          %v1378 = vor.u32 1.1754944e-38, %v1377
          %v1379 = vsel %vm1376, %v1378, %v1374
          %v1380 = vrcp.pop %v1260
          %v1381 = vmul.f32 %v1260, %v1380
          %v1382 = vsub.f32 1.0, %v1381
          %v1383 = vmul.f32 %v1380, %v1382
          %v1384 = vadd.f32 %v1380, %v1383
          %vm1385 = vweird.f32 %v1260
          %vm1386 = vweird.f32 %v1380
          %vm1387 = vmor %vm1385, %vm1386
          %v1388 = vsel %vm1387, %v1380, %v1384
          %v1389 = vand.u32 2147483647, %v1260
          %vm1390 = vcmp.eq.f32.partialorder %v1389, 8.507059e+37
          %v1391 = vand.u32 %v1260, 2147483648
          %v1392 = vor.u32 1.1754944e-38, %v1391
          %v1393 = vsel %vm1390, %v1392, %v1388
          %v1394 = vrcp.pop %v1261
          %v1395 = vmul.f32 %v1261, %v1394
          %v1396 = vsub.f32 1.0, %v1395
          %v1397 = vmul.f32 %v1394, %v1396
          %v1398 = vadd.f32 %v1394, %v1397
          %vm1399 = vweird.f32 %v1261
          %vm1400 = vweird.f32 %v1394
          %vm1401 = vmor %vm1399, %vm1400
          %v1402 = vsel %vm1401, %v1394, %v1398
          %v1403 = vand.u32 2147483647, %v1261
          %vm1404 = vcmp.eq.f32.partialorder %v1403, 8.507059e+37
          %v1405 = vand.u32 %v1261, 2147483648
          %v1406 = vor.u32 1.1754944e-38, %v1405
          %v1407 = vsel %vm1404, %v1406, %v1402
          %v1408 = vrcp.pop %v1262
          %v1409 = vmul.f32 %v1262, %v1408
          %v1410 = vsub.f32 1.0, %v1409
          %v1411 = vmul.f32 %v1408, %v1410
          %v1412 = vadd.f32 %v1408, %v1411
          %vm1413 = vweird.f32 %v1262
          %vm1414 = vweird.f32 %v1408
          %vm1415 = vmor %vm1413, %vm1414
          %v1416 = vsel %vm1415, %v1408, %v1412
          %v1417 = vand.u32 2147483647, %v1262
          %vm1418 = vcmp.eq.f32.partialorder %v1417, 8.507059e+37
          %v1419 = vand.u32 %v1262, 2147483648
          %v1420 = vor.u32 1.1754944e-38, %v1419
          %v1421 = vsel %vm1418, %v1420, %v1416
          %v1422 = vrcp.pop %v1263
          %v1423 = vmul.f32 %v1263, %v1422
          %v1424 = vsub.f32 1.0, %v1423
          %v1425 = vmul.f32 %v1422, %v1424
          %v1426 = vadd.f32 %v1422, %v1425
          %vm1427 = vweird.f32 %v1263
          %vm1428 = vweird.f32 %v1422
          %vm1429 = vmor %vm1427, %vm1428
          %v1430 = vsel %vm1429, %v1422, %v1426
          %v1431 = vand.u32 2147483647, %v1263
          %vm1432 = vcmp.eq.f32.partialorder %v1431, 8.507059e+37
          %v1433 = vand.u32 %v1263, 2147483648
          %v1434 = vor.u32 1.1754944e-38, %v1433
          %v1435 = vsel %vm1432, %v1434, %v1430
          %v1436 = vrcp.pop %v1264
          %v1437 = vmul.f32 %v1264, %v1436
          %v1438 = vsub.f32 1.0, %v1437
          %v1439 = vmul.f32 %v1436, %v1438
          %v1440 = vadd.f32 %v1436, %v1439
          %vm1441 = vweird.f32 %v1264
          %vm1442 = vweird.f32 %v1436
          %vm1443 = vmor %vm1441, %vm1442
          %v1444 = vsel %vm1443, %v1436, %v1440
          %v1445 = vand.u32 2147483647, %v1264
          %vm1446 = vcmp.eq.f32.partialorder %v1445, 8.507059e+37
          %v1447 = vand.u32 %v1264, 2147483648
          %v1448 = vor.u32 1.1754944e-38, %v1447
          %v1449 = vsel %vm1446, %v1448, %v1444
          %v1450 = vrcp.pop %v1265
          %v1451 = vmul.f32 %v1265, %v1450
          %v1452 = vsub.f32 1.0, %v1451
          %v1453 = vmul.f32 %v1450, %v1452
          %v1454 = vadd.f32 %v1450, %v1453
          %vm1455 = vweird.f32 %v1265
          %vm1456 = vweird.f32 %v1450
          %vm1457 = vmor %vm1455, %vm1456
          %v1458 = vsel %vm1457, %v1450, %v1454
          %v1459 = vand.u32 2147483647, %v1265
          %vm1460 = vcmp.eq.f32.partialorder %v1459, 8.507059e+37
          %v1461 = vand.u32 %v1265, 2147483648
          %v1462 = vor.u32 1.1754944e-38, %v1461
          %v1463 = vsel %vm1460, %v1462, %v1458
          %v1464 = vrcp.pop %v1266
          %v1465 = vmul.f32 %v1266, %v1464
          %v1466 = vsub.f32 1.0, %v1465
          %v1467 = vmul.f32 %v1464, %v1466
          %v1468 = vadd.f32 %v1464, %v1467
          %vm1469 = vweird.f32 %v1266
          %vm1470 = vweird.f32 %v1464
          %vm1471 = vmor %vm1469, %vm1470
          %v1472 = vsel %vm1471, %v1464, %v1468
          %v1473 = vand.u32 2147483647, %v1266
          %vm1474 = vcmp.eq.f32.partialorder %v1473, 8.507059e+37
          %v1475 = vand.u32 %v1266, 2147483648
          %v1476 = vor.u32 1.1754944e-38, %v1475
          %v1477 = vsel %vm1474, %v1476, %v1472
          %v1478 = vrcp.pop %v1267
          %v1479 = vmul.f32 %v1267, %v1478
          %v1480 = vsub.f32 1.0, %v1479
          %v1481 = vmul.f32 %v1478, %v1480
          %v1482 = vadd.f32 %v1478, %v1481
          %vm1483 = vweird.f32 %v1267
          %vm1484 = vweird.f32 %v1478
          %vm1485 = vmor %vm1483, %vm1484
          %v1486 = vsel %vm1485, %v1478, %v1482
          %v1487 = vand.u32 2147483647, %v1267
          %vm1488 = vcmp.eq.f32.partialorder %v1487, 8.507059e+37
          %v1489 = vand.u32 %v1267, 2147483648
          %v1490 = vor.u32 1.1754944e-38, %v1489
          %v1491 = vsel %vm1488, %v1490, %v1486
          %1493 = vset.pattern.permute.xlu0 0
          %1494 = vperm.xlu0 %1493, %v1281
          %v1495 = vpop.permute.xlu0 %1494
          %1498 = vset.pattern.permute.xlu0 0
          %1499 = vperm.xlu0 %1498, %v1295
          %v1500 = vpop.permute.xlu0 %1499
          %1503 = vset.pattern.permute.xlu0 0
          %1504 = vperm.xlu0 %1503, %v1309
          %v1505 = vpop.permute.xlu0 %1504
          %1508 = vset.pattern.permute.xlu0 0
          %1509 = vperm.xlu0 %1508, %v1323
          %v1510 = vpop.permute.xlu0 %1509
          %1513 = vset.pattern.permute.xlu0 0
          %1514 = vperm.xlu0 %1513, %v1337
          %v1515 = vpop.permute.xlu0 %1514
          %1518 = vset.pattern.permute.xlu0 0
          %1519 = vperm.xlu0 %1518, %v1351
          %v1520 = vpop.permute.xlu0 %1519
          %1523 = vset.pattern.permute.xlu0 0
          %1524 = vperm.xlu0 %1523, %v1365
          %v1525 = vpop.permute.xlu0 %1524
          %1528 = vset.pattern.permute.xlu0 0
          %1529 = vperm.xlu0 %1528, %v1379
          %v1530 = vpop.permute.xlu0 %1529
          %1533 = vset.pattern.permute.xlu0 0
          %1534 = vperm.xlu0 %1533, %v1393
          %v1535 = vpop.permute.xlu0 %1534
          %1538 = vset.pattern.permute.xlu0 0
          %1539 = vperm.xlu0 %1538, %v1407
          %v1540 = vpop.permute.xlu0 %1539
          %1543 = vset.pattern.permute.xlu0 0
          %1544 = vperm.xlu0 %1543, %v1421
          %v1545 = vpop.permute.xlu0 %1544
          %1548 = vset.pattern.permute.xlu0 0
          %1549 = vperm.xlu0 %1548, %v1435
          %v1550 = vpop.permute.xlu0 %1549
          %1553 = vset.pattern.permute.xlu0 0
          %1554 = vperm.xlu0 %1553, %v1449
          %v1555 = vpop.permute.xlu0 %1554
          %1558 = vset.pattern.permute.xlu0 0
          %1559 = vperm.xlu0 %1558, %v1463
          %v1560 = vpop.permute.xlu0 %1559
          %1563 = vset.pattern.permute.xlu0 0
          %1564 = vperm.xlu0 %1563, %v1477
          %v1565 = vpop.permute.xlu0 %1564
          %1568 = vset.pattern.permute.xlu0 0
          %1569 = vperm.xlu0 %1568, %v1491
          %v1570 = vpop.permute.xlu0 %1569
          %v1572 = vmul.f32 %v1236, %v1495
          %v1573 = vmul.f32 %v1237, %v1500
          %v1574 = vmul.f32 %v1238, %v1505
          %v1575 = vmul.f32 %v1239, %v1510
          %v1576 = vmul.f32 %v1240, %v1515
          %v1577 = vmul.f32 %v1241, %v1520
          %v1578 = vmul.f32 %v1242, %v1525
          %v1579 = vmul.f32 %v1243, %v1530
          %v1580 = vmul.f32 %v1244, %v1535
          %v1581 = vmul.f32 %v1245, %v1540
          %v1582 = vmul.f32 %v1246, %v1545
          %v1583 = vmul.f32 %v1247, %v1550
          %v1584 = vmul.f32 %v1248, %v1555
          %v1585 = vmul.f32 %v1249, %v1560
          %v1586 = vmul.f32 %v1250, %v1565
          %v1587 = vmul.f32 %v1251, %v1570
          %v1588 = vmax.f32 %v1572, 0.0
          %v1589 = vmax.f32 %v1573, 0.0
          %v1590 = vmax.f32 %v1574, 0.0
          %v1591 = vmax.f32 %v1575, 0.0
          %v1592 = vmax.f32 %v1576, 0.0
          %v1593 = vmax.f32 %v1577, 0.0
          %v1594 = vmax.f32 %v1578, 0.0
          %v1595 = vmax.f32 %v1579, 0.0
          %v1596 = vmax.f32 %v1580, 0.0
          %v1597 = vmax.f32 %v1581, 0.0
          %v1598 = vmax.f32 %v1582, 0.0
          %v1599 = vmax.f32 %v1583, 0.0
          %v1600 = vmax.f32 %v1584, 0.0
          %v1601 = vmax.f32 %v1585, 0.0
          %v1602 = vmax.f32 %v1586, 0.0
          %v1603 = vmax.f32 %v1587, 0.0
          %1604 = vst [vmem:[%s395] sm:$0xff] %v1588
          %1605 = vst [vmem:[%s395 + $0x8] sm:$0xff] %v1589
          %1606 = vst [vmem:[%s395 + $0x10] sm:$0xff] %v1590
          %1607 = vst [vmem:[%s395 + $0x18] sm:$0xff] %v1591
          %1608 = vst [vmem:[%s395 + $0x20] sm:$0xff] %v1592
          %1609 = vst [vmem:[%s395 + $0x28] sm:$0xff] %v1593
          %1610 = vst [vmem:[%s395 + $0x30] sm:$0xff] %v1594
          %1611 = vst [vmem:[%s395 + $0x38] sm:$0xff] %v1595
          %1612 = vst [vmem:[%s395 + $0x40] sm:$0xff] %v1596
          %1613 = vst [vmem:[%s395 + $0x48] sm:$0xff] %v1597
          %1614 = vst [vmem:[%s395 + $0x50] sm:$0xff] %v1598
          %1615 = vst [vmem:[%s395 + $0x58] sm:$0xff] %v1599
          %1616 = vst [vmem:[%s395 + $0x60] sm:$0xff] %v1600
          %1617 = vst [vmem:[%s395 + $0x68] sm:$0xff] %v1601
          %1618 = vst [vmem:[%s395 + $0x70] sm:$0xff] %v1602
          %1619 = vst [vmem:[%s395 + $0x78] sm:$0xff] %v1603
          %v1620 = vmul.f32 %v1588, %v1588
          %v1621 = vmul.f32 %v1589, %v1589
          %v1622 = vmul.f32 %v1590, %v1590
          %v1623 = vmul.f32 %v1591, %v1591
          %v1624 = vmul.f32 %v1592, %v1592
          %v1625 = vmul.f32 %v1593, %v1593
          %v1626 = vmul.f32 %v1594, %v1594
          %v1627 = vmul.f32 %v1595, %v1595
          %v1628 = vmul.f32 %v1596, %v1596
          %v1629 = vmul.f32 %v1597, %v1597
          %v1630 = vmul.f32 %v1598, %v1598
          %v1631 = vmul.f32 %v1599, %v1599
          %v1632 = vmul.f32 %v1600, %v1600
          %v1633 = vmul.f32 %v1601, %v1601
          %v1634 = vmul.f32 %v1602, %v1602
          %v1635 = vmul.f32 %v1603, %v1603
          %1636 = vadd.xlane.f32.xlu0 %v1620
          %v1637 = vpop.xlane.xlu0 %1636
          %1638 = vadd.xlane.f32.xlu0 %v1621
          %v1639 = vpop.xlane.xlu0 %1638
          %1640 = vadd.xlane.f32.xlu0 %v1622
          %v1641 = vpop.xlane.xlu0 %1640
          %1642 = vadd.xlane.f32.xlu0 %v1623
          %v1643 = vpop.xlane.xlu0 %1642
          %1644 = vadd.xlane.f32.xlu0 %v1624
          %v1645 = vpop.xlane.xlu0 %1644
          %1646 = vadd.xlane.f32.xlu0 %v1625
          %v1647 = vpop.xlane.xlu0 %1646
          %1648 = vadd.xlane.f32.xlu0 %v1626
          %v1649 = vpop.xlane.xlu0 %1648
          %1650 = vadd.xlane.f32.xlu0 %v1627
          %v1651 = vpop.xlane.xlu0 %1650
          %1652 = vadd.xlane.f32.xlu0 %v1628
          %v1653 = vpop.xlane.xlu0 %1652
          %1654 = vadd.xlane.f32.xlu0 %v1629
          %v1655 = vpop.xlane.xlu0 %1654
          %1656 = vadd.xlane.f32.xlu0 %v1630
          %v1657 = vpop.xlane.xlu0 %1656
          %1658 = vadd.xlane.f32.xlu0 %v1631
          %v1659 = vpop.xlane.xlu0 %1658
          %1660 = vadd.xlane.f32.xlu0 %v1632
          %v1661 = vpop.xlane.xlu0 %1660
          %1662 = vadd.xlane.f32.xlu0 %v1633
          %v1663 = vpop.xlane.xlu0 %1662
          %1664 = vadd.xlane.f32.xlu0 %v1634
          %v1665 = vpop.xlane.xlu0 %1664
          %1666 = vadd.xlane.f32.xlu0 %v1635
          %v1667 = vpop.xlane.xlu0 %1666
          %v1668 = vmax.f32 %v1637, 1e-24
          %v1669 = vmax.f32 %v1639, 1e-24
          %v1670 = vmax.f32 %v1641, 1e-24
          %v1671 = vmax.f32 %v1643, 1e-24
          %v1672 = vmax.f32 %v1645, 1e-24
          %v1673 = vmax.f32 %v1647, 1e-24
          %v1674 = vmax.f32 %v1649, 1e-24
          %v1675 = vmax.f32 %v1651, 1e-24
          %v1676 = vmax.f32 %v1653, 1e-24
          %v1677 = vmax.f32 %v1655, 1e-24
          %v1678 = vmax.f32 %v1657, 1e-24
          %v1679 = vmax.f32 %v1659, 1e-24
          %v1680 = vmax.f32 %v1661, 1e-24
          %v1681 = vmax.f32 %v1663, 1e-24
          %v1682 = vmax.f32 %v1665, 1e-24
          %v1683 = vmax.f32 %v1667, 1e-24
          %v1684 = vrsqrt.pop %v1668
          %v1685 = vmul.f32 %v1684, %v1668
          %v1686 = vmul.f32 %v1685, %v1684
          %v1687 = vmul.f32 0.5, %v1686
          %v1688 = vsub.f32 1.5, %v1687
          %v1689 = vmul.f32 %v1684, %v1688
          %vm1690 = vweird.f32 %v1668
          %vm1691 = vweird.f32 %v1684
          %vm1692 = vmor %vm1690, %vm1691
          %v1693 = vsel %vm1692, %v1684, %v1689
          %v1694 = vrsqrt.pop %v1669
          %v1695 = vmul.f32 %v1694, %v1669
          %v1696 = vmul.f32 %v1695, %v1694
          %v1697 = vmul.f32 0.5, %v1696
          %v1698 = vsub.f32 1.5, %v1697
          %v1699 = vmul.f32 %v1694, %v1698
          %vm1700 = vweird.f32 %v1669
          %vm1701 = vweird.f32 %v1694
          %vm1702 = vmor %vm1700, %vm1701
          %v1703 = vsel %vm1702, %v1694, %v1699
          %v1704 = vrsqrt.pop %v1670
          %v1705 = vmul.f32 %v1704, %v1670
          %v1706 = vmul.f32 %v1705, %v1704
          %v1707 = vmul.f32 0.5, %v1706
          %v1708 = vsub.f32 1.5, %v1707
          %v1709 = vmul.f32 %v1704, %v1708
          %vm1710 = vweird.f32 %v1670
          %vm1711 = vweird.f32 %v1704
          %vm1712 = vmor %vm1710, %vm1711
          %v1713 = vsel %vm1712, %v1704, %v1709
          %v1714 = vrsqrt.pop %v1671
          %v1715 = vmul.f32 %v1714, %v1671
          %v1716 = vmul.f32 %v1715, %v1714
          %v1717 = vmul.f32 0.5, %v1716
          %v1718 = vsub.f32 1.5, %v1717
          %v1719 = vmul.f32 %v1714, %v1718
          %vm1720 = vweird.f32 %v1671
          %vm1721 = vweird.f32 %v1714
          %vm1722 = vmor %vm1720, %vm1721
          %v1723 = vsel %vm1722, %v1714, %v1719
          %v1724 = vrsqrt.pop %v1672
          %v1725 = vmul.f32 %v1724, %v1672
          %v1726 = vmul.f32 %v1725, %v1724
          %v1727 = vmul.f32 0.5, %v1726
          %v1728 = vsub.f32 1.5, %v1727
          %v1729 = vmul.f32 %v1724, %v1728
          %vm1730 = vweird.f32 %v1672
          %vm1731 = vweird.f32 %v1724
          %vm1732 = vmor %vm1730, %vm1731
          %v1733 = vsel %vm1732, %v1724, %v1729
          %v1734 = vrsqrt.pop %v1673
          %v1735 = vmul.f32 %v1734, %v1673
          %v1736 = vmul.f32 %v1735, %v1734
          %v1737 = vmul.f32 0.5, %v1736
          %v1738 = vsub.f32 1.5, %v1737
          %v1739 = vmul.f32 %v1734, %v1738
          %vm1740 = vweird.f32 %v1673
          %vm1741 = vweird.f32 %v1734
          %vm1742 = vmor %vm1740, %vm1741
          %v1743 = vsel %vm1742, %v1734, %v1739
          %v1744 = vrsqrt.pop %v1674
          %v1745 = vmul.f32 %v1744, %v1674
          %v1746 = vmul.f32 %v1745, %v1744
          %v1747 = vmul.f32 0.5, %v1746
          %v1748 = vsub.f32 1.5, %v1747
          %v1749 = vmul.f32 %v1744, %v1748
          %vm1750 = vweird.f32 %v1674
          %vm1751 = vweird.f32 %v1744
          %vm1752 = vmor %vm1750, %vm1751
          %v1753 = vsel %vm1752, %v1744, %v1749
          %v1754 = vrsqrt.pop %v1675
          %v1755 = vmul.f32 %v1754, %v1675
          %v1756 = vmul.f32 %v1755, %v1754
          %v1757 = vmul.f32 0.5, %v1756
          %v1758 = vsub.f32 1.5, %v1757
          %v1759 = vmul.f32 %v1754, %v1758
          %vm1760 = vweird.f32 %v1675
          %vm1761 = vweird.f32 %v1754
          %vm1762 = vmor %vm1760, %vm1761
          %v1763 = vsel %vm1762, %v1754, %v1759
          %v1764 = vrsqrt.pop %v1676
          %v1765 = vmul.f32 %v1764, %v1676
          %v1766 = vmul.f32 %v1765, %v1764
          %v1767 = vmul.f32 0.5, %v1766
          %v1768 = vsub.f32 1.5, %v1767
          %v1769 = vmul.f32 %v1764, %v1768
          %vm1770 = vweird.f32 %v1676
          %vm1771 = vweird.f32 %v1764
          %vm1772 = vmor %vm1770, %vm1771
          %v1773 = vsel %vm1772, %v1764, %v1769
          %v1774 = vrsqrt.pop %v1677
          %v1775 = vmul.f32 %v1774, %v1677
          %v1776 = vmul.f32 %v1775, %v1774
          %v1777 = vmul.f32 0.5, %v1776
          %v1778 = vsub.f32 1.5, %v1777
          %v1779 = vmul.f32 %v1774, %v1778
          %vm1780 = vweird.f32 %v1677
          %vm1781 = vweird.f32 %v1774
          %vm1782 = vmor %vm1780, %vm1781
          %v1783 = vsel %vm1782, %v1774, %v1779
          %v1784 = vrsqrt.pop %v1678
          %v1785 = vmul.f32 %v1784, %v1678
          %v1786 = vmul.f32 %v1785, %v1784
          %v1787 = vmul.f32 0.5, %v1786
          %v1788 = vsub.f32 1.5, %v1787
          %v1789 = vmul.f32 %v1784, %v1788
          %vm1790 = vweird.f32 %v1678
          %vm1791 = vweird.f32 %v1784
          %vm1792 = vmor %vm1790, %vm1791
          %v1793 = vsel %vm1792, %v1784, %v1789
          %v1794 = vrsqrt.pop %v1679
          %v1795 = vmul.f32 %v1794, %v1679
          %v1796 = vmul.f32 %v1795, %v1794
          %v1797 = vmul.f32 0.5, %v1796
          %v1798 = vsub.f32 1.5, %v1797
          %v1799 = vmul.f32 %v1794, %v1798
          %vm1800 = vweird.f32 %v1679
          %vm1801 = vweird.f32 %v1794
          %vm1802 = vmor %vm1800, %vm1801
          %v1803 = vsel %vm1802, %v1794, %v1799
          %v1804 = vrsqrt.pop %v1680
          %v1805 = vmul.f32 %v1804, %v1680
          %v1806 = vmul.f32 %v1805, %v1804
          %v1807 = vmul.f32 0.5, %v1806
          %v1808 = vsub.f32 1.5, %v1807
          %v1809 = vmul.f32 %v1804, %v1808
          %vm1810 = vweird.f32 %v1680
          %vm1811 = vweird.f32 %v1804
          %vm1812 = vmor %vm1810, %vm1811
          %v1813 = vsel %vm1812, %v1804, %v1809
          %v1814 = vrsqrt.pop %v1681
          %v1815 = vmul.f32 %v1814, %v1681
          %v1816 = vmul.f32 %v1815, %v1814
          %v1817 = vmul.f32 0.5, %v1816
          %v1818 = vsub.f32 1.5, %v1817
          %v1819 = vmul.f32 %v1814, %v1818
          %vm1820 = vweird.f32 %v1681
          %vm1821 = vweird.f32 %v1814
          %vm1822 = vmor %vm1820, %vm1821
          %v1823 = vsel %vm1822, %v1814, %v1819
          %v1824 = vrsqrt.pop %v1682
          %v1825 = vmul.f32 %v1824, %v1682
          %v1826 = vmul.f32 %v1825, %v1824
          %v1827 = vmul.f32 0.5, %v1826
          %v1828 = vsub.f32 1.5, %v1827
          %v1829 = vmul.f32 %v1824, %v1828
          %vm1830 = vweird.f32 %v1682
          %vm1831 = vweird.f32 %v1824
          %vm1832 = vmor %vm1830, %vm1831
          %v1833 = vsel %vm1832, %v1824, %v1829
          %v1834 = vrsqrt.pop %v1683
          %v1835 = vmul.f32 %v1834, %v1683
          %v1836 = vmul.f32 %v1835, %v1834
          %v1837 = vmul.f32 0.5, %v1836
          %v1838 = vsub.f32 1.5, %v1837
          %v1839 = vmul.f32 %v1834, %v1838
          %vm1840 = vweird.f32 %v1683
          %vm1841 = vweird.f32 %v1834
          %vm1842 = vmor %vm1840, %vm1841
          %v1843 = vsel %vm1842, %v1834, %v1839
          %v1844 = vmul.f32 %v1588, %v1693
          %v1845 = vmul.f32 %v1589, %v1703
          %v1846 = vmul.f32 %v1590, %v1713
          %v1847 = vmul.f32 %v1591, %v1723
          %v1848 = vmul.f32 %v1592, %v1733
          %v1849 = vmul.f32 %v1593, %v1743
          %v1850 = vmul.f32 %v1594, %v1753
          %v1851 = vmul.f32 %v1595, %v1763
          %v1852 = vmul.f32 %v1596, %v1773
          %v1853 = vmul.f32 %v1597, %v1783
          %v1854 = vmul.f32 %v1598, %v1793
          %v1855 = vmul.f32 %v1599, %v1803
          %v1856 = vmul.f32 %v1600, %v1813
          %v1857 = vmul.f32 %v1601, %v1823
          %v1858 = vmul.f32 %v1602, %v1833
          %v1859 = vmul.f32 %v1603, %v1843
          %1860 = vst [vmem:[%s402] sm:$0xff] %v1844
          %1861 = vst [vmem:[%s402 + $0x8] sm:$0xff] %v1845
          %1862 = vst [vmem:[%s402 + $0x10] sm:$0xff] %v1846
          %1863 = vst [vmem:[%s402 + $0x18] sm:$0xff] %v1847
          %1864 = vst [vmem:[%s402 + $0x20] sm:$0xff] %v1848
          %1865 = vst [vmem:[%s402 + $0x28] sm:$0xff] %v1849
          %1866 = vst [vmem:[%s402 + $0x30] sm:$0xff] %v1850
          %1867 = vst [vmem:[%s402 + $0x38] sm:$0xff] %v1851
          %1868 = vst [vmem:[%s402 + $0x40] sm:$0xff] %v1852
          %1869 = vst [vmem:[%s402 + $0x48] sm:$0xff] %v1853
          %1870 = vst [vmem:[%s402 + $0x50] sm:$0xff] %v1854
          %1871 = vst [vmem:[%s402 + $0x58] sm:$0xff] %v1855
          %1872 = vst [vmem:[%s402 + $0x60] sm:$0xff] %v1856
          %1873 = vst [vmem:[%s402 + $0x68] sm:$0xff] %v1857
          %1874 = vst [vmem:[%s402 + $0x70] sm:$0xff] %v1858
          %1875 = vst [vmem:[%s402 + $0x78] sm:$0xff] %v1859
        $region64: #{tpu_custom_call.1} parent=35 // pred_fallthru
          _
        %s1876 = sand.u32 %s167, 1
        %s1877 = scalar_lea.sflag [#allocation9], %s1876
        %s1878 = sand.u32 %s167, 1
        %s1879 = smul.addr %s1878, 128
        %s1880 = scalar_lea.vmem [#allocation15], %s1879
        %s1881 = sand.u32 %s193, 1
        %s1882 = scalar_lea.sflag [#allocation17], %s1881
        %s1883 = sand.u32 %s193, 1
        %s1884 = smul.addr %s1883, 128
        %s1885 = scalar_lea.vmem [#allocation16], %s1884
        // Predicated region
        $region65: #{tpu_custom_call.1} parent=35 // pred_check
          %p1886 = pneg %p177
        $region66: #{tpu_custom_call.1} parent=35 // pred_check_branch
          %1888 = sbr.rel (%p1886) target = $region68
        $region67: #{tpu_custom_call.1} parent=35 // pred_region
          %s1889 = smul.u32 16, %s45
          %1891 = vsyncadd %s1877, 0
          %s1892 = smul.addr %s1889, 8
          %s1893 = scalar_lea.hbm %s5, %s1892
          %s1894 = sshll.u32 %s1880, 4
          %s1895 = int_to_ptr.vmem [resolvable:$true] %s1894
          %s1896 = sshll.u32 %s1893, 4
          %s1897 = int_to_ptr.hbm [resolvable:$true] %s1896
          %1902 = dma.vmem_to_hbm [thread:$0]  %s1895, 2048, %s1897, %s1877, 128, 128, 8
        $region68: #{tpu_custom_call.1} parent=35 // pred_fallthru
          _
        // Predicated region
        $region69: #{tpu_custom_call.1} parent=35 // pred_check
          %p1903 = pneg %p203
        $region70: #{tpu_custom_call.1} parent=35 // pred_check_branch
          %1905 = sbr.rel (%p1903) target = $region72
        $region71: #{tpu_custom_call.1} parent=35 // pred_region
          %s1906 = smul.u32 16, %s45
          %1908 = vsyncadd %s1882, 0
          %s1909 = smul.addr %s1906, 8
          %s1910 = scalar_lea.hbm %s6, %s1909
          %s1911 = sshll.u32 %s1885, 4
          %s1912 = int_to_ptr.vmem [resolvable:$true] %s1911
          %s1913 = sshll.u32 %s1910, 4
          %s1914 = int_to_ptr.hbm [resolvable:$true] %s1913
          %1919 = dma.vmem_to_hbm [thread:$0]  %s1912, 2048, %s1914, %s1882, 128, 128, 8
        $region72: #{tpu_custom_call.1} parent=35 // pred_fallthru
          _
      $region36: #{tpu_custom_call.1} parent=5 // pred_fallthru
        _
      %p1920 = scmp.le.s32.totalorder 2, %s36
      // Predicated region
      $region73: #{tpu_custom_call.1} parent=5 // pred_check
        %p1921 = pneg %p1920
      $region74: #{tpu_custom_call.1} parent=5 // pred_check_branch
        %1923 = sbr.rel (%p1921) target = $region76
      $region75: #{tpu_custom_call.1} parent=5 // pred_region
        %s1924 = ssub.s32 %s36, 2
        // Predicated region
        $region77: #{tpu_custom_call.1} parent=75 // pred_check
          %p1925 = pneg %p183
        $region78: #{tpu_custom_call.1} parent=75 // pred_check_branch
          %1927 = sbr.rel (%p1925) target = $region80
        $region79: #{tpu_custom_call.1} parent=75 // pred_region
          %s1928 = sand.u32 %s168, 1
          %s1929 = scalar_lea.sflag [#allocation9], %s1928
          %s1930 = sand.u32 %s168, 1
          %s1931 = smul.addr %s1930, 128
          %s1932 = scalar_lea.vmem [#allocation15], %s1931
          %1934 = dma.done %s1929, 2048
        $region80: #{tpu_custom_call.1} parent=75 // pred_fallthru
          _
        // Predicated region
        $region81: #{tpu_custom_call.1} parent=75 // pred_check
          %p1935 = pneg %p209
        $region82: #{tpu_custom_call.1} parent=75 // pred_check_branch
          %1937 = sbr.rel (%p1935) target = $region84
        $region83: #{tpu_custom_call.1} parent=75 // pred_region
          %s1938 = sand.u32 %s194, 1
          %s1939 = scalar_lea.sflag [#allocation17], %s1938
          %s1940 = sand.u32 %s194, 1
          %s1941 = smul.addr %s1940, 128
          %s1942 = scalar_lea.vmem [#allocation16], %s1941
          %1944 = dma.done %s1939, 2048
        $region84: #{tpu_custom_call.1} parent=75 // pred_fallthru
          _
      $region76: #{tpu_custom_call.1} parent=5 // pred_fallthru
        _
    $region6: #{tpu_custom_call.1} parent=1 // loop_footer
      %s40 = sadd.s32 1, %s36
    $region7: #{tpu_custom_call.1} parent=1 // loop_footer_branch
      %35 = sbr.rel target = $region3
    $region8: #{tpu_custom_call.1} parent=1 // loop_exit
      _
    %1945 = vsyncpa [#allocation8], 1
    %s1946 = scalar_lea.sflag [#allocation8], 1
    %1947 = vsyncpa %s1946, 1
    %1948 = vsyncpa [#allocation11], 1
    %s1949 = scalar_lea.sflag [#allocation11], 1
    %1950 = vsyncpa %s1949, 1
    %1951 = vsyncpa [#allocation14], 1
    %s1952 = scalar_lea.sflag [#allocation14], 1
    %1953 = vsyncpa %s1952, 1
    %1954 = vsyncpa [#allocation9], 1
    %s1955 = scalar_lea.sflag [#allocation9], 1
    %1956 = vsyncpa %s1955, 1
    %1957 = vsyncpa [#allocation17], 1
    %s1958 = scalar_lea.sflag [#allocation17], 1
    %1959 = vsyncpa %s1958, 1

</llo_original>
